<compile_context>
chip_gen: v5e
topology: v5e:2x2
jax: 0.10.0
libtpu: 0.0.40
codegen_flags: <defaults>
</compile_context>

<pallas_src>
import functools

import jax
import jax.numpy as jnp
from jax.experimental import pallas as pl
from jax.experimental.pallas import tpu as pltpu

# g_config values from get_config()
H = 128          # hidden size
K = 100          # fc1 output size
TIME_STEP = 6    # number of unrolled output steps (== seq length used here)

KP = 128         # K padded to 128 lanes (unmasked vst)


def _round_up(x, m):
    return (x + m - 1) // m * m


def _bf16_transcendentals_ok():
    """bf16 EUP/VPU exists on v6e/v7x but not on v5e and older (review note)."""
    try:
        kind = jax.devices()[0].device_kind.lower()
    except Exception:
        return False
    return not any(tag in kind for tag in ("v2", "v3", "v4", "v5"))


GATE_BF16_DEFAULT = _bf16_transcendentals_ok()


def _sigmoid(x):
    # One EUP push (tanh) instead of exp + reciprocal.
    return 0.5 * (jnp.tanh(0.5 * x) + 1.0)


def base_lstm_kernel(track_ref, target_ref,
                     w_ih_t_ref, w_hh_t_ref, b_lstm_ref,
                     w_tfc_t_ref, b_tfc_ref,
                     w_fc1h_t_ref, w_fc1t_t_ref, b_fc1_ref,
                     relu_ref, xg_ref, *, gate_dtype):
    """One batch block: LSTM recurrence + per-step fc1/relu head (fc2 is XLA)."""
    f32 = jnp.float32
    wd = w_hh_t_ref.dtype                 # MXU operand dtype (bf16 default)
    T, BB, F = track_ref.shape

    # --- hoisted input projection: ONE (T*BB, F) @ (F, 4H) matmul + bias, ---
    # --- staged through an explicit VMEM scratch (not a live traced value) --
    x2d = track_ref[...].reshape(T * BB, F).astype(wd)
    xg = (jnp.dot(x2d, w_ih_t_ref[...], preferred_element_type=f32)
          + b_lstm_ref[...])                                      # (T*BB, 4H)
    xg_ref[...] = xg.astype(xg_ref.dtype)

    # --- loop-invariant target head (replaces per-step concat([h, tgt])) ----
    tgt = (jnp.dot(target_ref[...].astype(wd), w_tfc_t_ref[...],
                   preferred_element_type=f32)
           + b_tfc_ref[...])                                      # (BB, H)
    tgt_fc1 = (jnp.dot(tgt.astype(wd), w_fc1t_t_ref[...],
                       preferred_element_type=f32)
               + b_fc1_ref[...])                                  # (BB, KP)

    # --- LSTM recurrence: only h @ W_hh stays on the serial chain ----------
    h = jnp.zeros((BB, H), f32)
    c = jnp.zeros((BB, H), f32)
    for t in range(T):                    # static unroll (TIME_STEP = 6)
        gates = (xg_ref[t * BB:(t + 1) * BB, :].astype(f32)
                 + jnp.dot(h.astype(wd), w_hh_t_ref[...],
                           preferred_element_type=f32))           # (BB, 4H)
        g = gates.astype(gate_dtype)      # bf16 nonlinearities on v6e/v7x
        # PyTorch LSTM gate order: input, forget, cell(g), output.
        i_g = _sigmoid(g[:, 0 * H:1 * H])
        f_g = _sigmoid(g[:, 1 * H:2 * H])
        g_g = jnp.tanh(g[:, 2 * H:3 * H])
        o_g = _sigmoid(g[:, 3 * H:4 * H])
        c = f_g.astype(f32) * c + i_g.astype(f32) * g_g.astype(f32)
        h = o_g.astype(f32) * jnp.tanh(c.astype(gate_dtype)).astype(f32)

        # fc1 + relu head for this step (off the serial chain); lane-dense,
        # batch-major slab store: lanes [t*128, (t+1)*128) of the output row.
        fc1_t = (jnp.dot(h.astype(wd), w_fc1h_t_ref[...],
                         preferred_element_type=f32) + tgt_fc1)   # (BB, KP)
        relu_ref[:, t * KP:(t + 1) * KP] = jnp.maximum(fc1_t, 0.0).astype(
            relu_ref.dtype)


def prepare_params(params, mxu_dtype=jnp.bfloat16):
    """One-time weight preprocessing (transpose / pad / cast).

    Hoisted out of the per-call forward path (launch-overhead at small B)."""
    f32 = jnp.float32
    w_fc1_t = params["w_fc1"].T.astype(f32)                            # (2H, K)
    return {
        "w_ih_t": params["w_ih"].T.astype(mxu_dtype),                  # (F, 4H)
        "w_hh_t": params["w_hh"].T.astype(mxu_dtype),                  # (H, 4H)
        "b_lstm": (params["b_ih"] + params["b_hh"]).reshape(1, -1).astype(f32),
        "w_tfc_t": params["w_tfc"].T.astype(mxu_dtype),                # (F, H)
        "b_tfc": params["b_tfc"].reshape(1, -1).astype(f32),           # (1, H)
        "w_fc1h_t": jnp.pad(w_fc1_t[:H], ((0, 0), (0, KP - K))).astype(mxu_dtype),
        "w_fc1t_t": jnp.pad(w_fc1_t[H:], ((0, 0), (0, KP - K))).astype(mxu_dtype),
        "b_fc1": jnp.pad(params["b_fc1"].astype(f32), (0, KP - K)).reshape(1, -1),
        "w_fc2_t": params["w_fc2"].T.astype(f32),                      # (K, 2)
        "b_fc2": params["b_fc2"].astype(f32),                          # (2,)
    }


@functools.partial(jax.jit, static_argnames=("gate_bf16",))
def base_lstm_forward(track, target, prepped, gate_bf16=GATE_BF16_DEFAULT):
    """Pads/blocks the batch, launches the kernel, runs the tiny fc2 in XLA."""
    f32 = jnp.float32
    B, T, F = track.shape
    assert T == TIME_STEP

    wd = prepped["w_hh_t"].dtype
    use_bf16 = (wd == jnp.bfloat16)
    gate_dtype = jnp.bfloat16 if (gate_bf16 and use_bf16) else jnp.float32
    out_dtype = jnp.bfloat16 if use_bf16 else f32      # relu slab storage
    xg_dtype = wd                                      # xg scratch storage

    # Pad batch to a sublane multiple; block it over a parallel 1-D grid.
    B_pad = _round_up(max(B, 1), 8)
    bb = min(B_pad, 256)
    if B_pad // bb < 2 and B_pad >= 16:
        # keep >=2 blocks so the parallel axis can shard across v7x's 2 TCs
        bb = _round_up(B_pad // 2, 8)
    B_pad = _round_up(B_pad, bb)
    grid = (B_pad // bb,)

    # Track/target pads + time-major transpose of track are small (F=16) glue.
    track_tm = jnp.transpose(
        jnp.pad(track.astype(f32), ((0, B_pad - B), (0, 0), (0, 0))),
        (1, 0, 2))                                          # (T, B_pad, F)
    target_p = jnp.pad(target.astype(f32), ((0, B_pad - B), (0, 0)))

    in_specs = [
        pl.BlockSpec((T, bb, F), lambda i: (0, i, 0)),      # track (time-major)
        pl.BlockSpec((bb, F), lambda i: (i, 0)),            # target
        pl.BlockSpec((F, 4 * H), lambda i: (0, 0)),         # w_ih_t
        pl.BlockSpec((H, 4 * H), lambda i: (0, 0)),         # w_hh_t
        pl.BlockSpec((1, 4 * H), lambda i: (0, 0)),         # b_lstm (b_ih+b_hh)
        pl.BlockSpec((F, H), lambda i: (0, 0)),             # w_tfc_t
        pl.BlockSpec((1, H), lambda i: (0, 0)),             # b_tfc
        pl.BlockSpec((H, KP), lambda i: (0, 0)),            # w_fc1 (h half)
        pl.BlockSpec((H, KP), lambda i: (0, 0)),            # w_fc1 (target half)
        pl.BlockSpec((1, KP), lambda i: (0, 0)),            # b_fc1
    ]
    # Batch-major, lane-dense relu slab: (B_pad, T*128); row t lives in lanes
    # [t*128, (t+1)*128).  No wrapper transpose needed afterwards.
    out_specs = pl.BlockSpec((bb, T * KP), lambda i: (i, 0))

    relu_p = pl.pallas_call(
        functools.partial(base_lstm_kernel, gate_dtype=gate_dtype),
        grid=grid,
        in_specs=in_specs,
        out_specs=out_specs,
        out_shape=jax.ShapeDtypeStruct((B_pad, T * KP), out_dtype),
        scratch_shapes=[pltpu.VMEM((T * bb, 4 * H), xg_dtype)],
        compiler_params=pltpu.CompilerParams(
            dimension_semantics=(pltpu.PARALLEL,)),
    )(track_tm, target_p,
      prepped["w_ih_t"], prepped["w_hh_t"], prepped["b_lstm"],
      prepped["w_tfc_t"], prepped["b_tfc"],
      prepped["w_fc1h_t"], prepped["w_fc1t_t"], prepped["b_fc1"])

    # Glue: (B_pad, T*KP) -> (B, T, K) is a free reshape + slice (no transpose).
    relus = relu_p.reshape(B_pad, T, KP)[:B, :, :K]
    # fc2 (K -> 2) stays outside the kernel: tiny XLA matmul, avoids writing a
    # 128-lane-padded outs slab from the kernel.
    outs = (jnp.dot(relus.astype(f32), prepped["w_fc2_t"],
                    preferred_element_type=f32) + prepped["b_fc2"])
    return outs, relus


def base_lstm_reference(track, target, params):
    """Plain-JAX reference matching torch semantics (for verification)."""
    target_out = target @ params["w_tfc"].T + params["b_tfc"]
    B = track.shape[0]
    h = jnp.zeros((B, H), jnp.float32)
    c = jnp.zeros((B, H), jnp.float32)
    outs, relus = [], []
    for t in range(TIME_STEP):
        x_t = track[:, t, :]
        gates = (x_t @ params["w_ih"].T + params["b_ih"]
                 + h @ params["w_hh"].T + params["b_hh"])
        i_g = jax.nn.sigmoid(gates[:, 0 * H:1 * H])
        f_g = jax.nn.sigmoid(gates[:, 1 * H:2 * H])
        g_g = jnp.tanh(gates[:, 2 * H:3 * H])
        o_g = jax.nn.sigmoid(gates[:, 3 * H:4 * H])
        c = f_g * c + i_g * g_g
        h = o_g * jnp.tanh(c)
        combined = jnp.concatenate([h, target_out], axis=1)
        relu = jnp.maximum(combined @ params["w_fc1"].T + params["b_fc1"], 0.0)
        out = relu @ params["w_fc2"].T + params["b_fc2"]
        outs.append(out)
        relus.append(relu)
    return jnp.stack(outs, axis=1), jnp.stack(relus, axis=1)


def init_params(key, f_in_num):
    """Deterministic PyTorch-style uniform init (shapes from __init__)."""
    ks = jax.random.split(key, 10)

    def uni(k, shape, fan_in):
        bound = 1.0 / jnp.sqrt(jnp.float32(fan_in))
        return jax.random.uniform(k, shape, jnp.float32, -bound, bound)

    return {
        # target_fc: Linear(f_in_num, H)
        "w_tfc": uni(ks[0], (H, f_in_num), f_in_num),
        "b_tfc": uni(ks[1], (H,), f_in_num),
        # lstm: input_size=f_in_num, hidden_size=H, num_layers=1
        "w_ih": uni(ks[2], (4 * H, f_in_num), H),
        "w_hh": uni(ks[3], (4 * H, H), H),
        "b_ih": uni(ks[4], (4 * H,), H),
        "b_hh": uni(ks[5], (4 * H,), H),
        # fc1: Linear(2H, K)
        "w_fc1": uni(ks[6], (K, 2 * H), 2 * H),
        "b_fc1": uni(ks[7], (K,), 2 * H),
        # fc2: Linear(K, 2)
        "w_fc2": uni(ks[8], (2, K), K),
        "b_fc2": uni(ks[9], (2,), K),
    }


if __name__ == "__main__":
    B = 2          # batch
    F_IN = 16      # f_in_num (constructor argument; small)
    T = TIME_STEP  # sequence length (forward reads r_out[:, 0..5, :])

    key = jax.random.PRNGKey(0)
    k_trk, k_tgt, k_par = jax.random.split(key, 3)
    track = jax.random.normal(k_trk, (B, T, F_IN), jnp.float32)
    target = jax.random.normal(k_tgt, (B, F_IN), jnp.float32)
    params = init_params(k_par, F_IN)

    ref_outs, ref_relus = base_lstm_reference(track, target, params)

    # f32 MXU + f32 gate path: strict check against the plain-JAX reference.
    prepped_f32 = prepare_params(params, mxu_dtype=jnp.float32)
    outs32, relus32 = jax.block_until_ready(
        base_lstm_forward(track, target, prepped_f32))
    assert outs32.shape == (B, T, 2) and relus32.shape == (B, T, K)
    assert jnp.allclose(outs32, ref_outs, atol=2e-4, rtol=2e-4)
    assert jnp.allclose(relus32, ref_relus, atol=2e-4, rtol=2e-4)

    # Default bf16-MXU-operand path (bf16 gates on v6e/v7x, bf16 relu slab):
    # loose numerical check.
    prepped_bf = prepare_params(params)
    outs_bf, relus_bf = jax.block_until_ready(
        base_lstm_forward(track, target, prepped_bf))
    assert outs_bf.shape == (B, T, 2) and relus_bf.shape == (B, T, K)
    assert jnp.max(jnp.abs(outs_bf - ref_outs)) < 0.25
    assert jnp.max(jnp.abs(relus_bf.astype(jnp.float32) - ref_relus)) < 0.25

    print("KERNEL_OK")
</pallas_src>

<mosaic_0001>
module attributes {stable_mosaic.version = 11 : i64} {
  func.func @base_lstm_kernel(%arg0: i32, %arg1: memref<6x8x16xf32, #tpu.memory_space<vmem>>, %arg2: memref<8x16xf32, #tpu.memory_space<vmem>>, %arg3: memref<16x512xf32, #tpu.memory_space<vmem>>, %arg4: memref<128x512xf32, #tpu.memory_space<vmem>>, %arg5: memref<1x512xf32, #tpu.memory_space<vmem>>, %arg6: memref<16x128xf32, #tpu.memory_space<vmem>>, %arg7: memref<1x128xf32, #tpu.memory_space<vmem>>, %arg8: memref<128x128xf32, #tpu.memory_space<vmem>>, %arg9: memref<128x128xf32, #tpu.memory_space<vmem>>, %arg10: memref<1x128xf32, #tpu.memory_space<vmem>>, %arg11: memref<8x768xf32, #tpu.memory_space<vmem>>, %arg12: memref<48x512xf32, #tpu.memory_space<vmem>>) attributes {dimension_semantics = [#tpu.dimension_semantics<parallel>], iteration_bounds = array<i64: 1>, scalar_prefetch = 0 : i64, scratch_operands = 1 : i64, tpu.core_type = #tpu.core_type<tc>, window_params = [{transform_indices = @transform_0, window_bounds = array<i64: 6, 8, 16>}, {transform_indices = @transform_1, window_bounds = array<i64: 8, 16>}, {pipeline_mode = #tpu.pipeline_mode<synchronous>, transform_indices = @transform_2, window_bounds = array<i64: 16, 512>}, {pipeline_mode = #tpu.pipeline_mode<synchronous>, transform_indices = @transform_3, window_bounds = array<i64: 128, 512>}, {pipeline_mode = #tpu.pipeline_mode<synchronous>, transform_indices = @transform_4, window_bounds = array<i64: 1, 512>}, {pipeline_mode = #tpu.pipeline_mode<synchronous>, transform_indices = @transform_5, window_bounds = array<i64: 16, 128>}, {pipeline_mode = #tpu.pipeline_mode<synchronous>, transform_indices = @transform_6, window_bounds = array<i64: 1, 128>}, {pipeline_mode = #tpu.pipeline_mode<synchronous>, transform_indices = @transform_7, window_bounds = array<i64: 128, 128>}, {pipeline_mode = #tpu.pipeline_mode<synchronous>, transform_indices = @transform_8, window_bounds = array<i64: 128, 128>}, {pipeline_mode = #tpu.pipeline_mode<synchronous>, transform_indices = @transform_9, window_bounds = array<i64: 1, 128>}, {transform_indices = @transform_10, window_bounds = array<i64: 8, 768>}]} {
    %c0 = arith.constant 0 : index
    %c0_0 = arith.constant 0 : index
    %c0_1 = arith.constant 0 : index
    %0 = vector.load %arg1[%c0, %c0_0, %c0_1] : memref<6x8x16xf32, #tpu.memory_space<vmem>>, vector<6x8x16xf32>
    %1 = vector.shape_cast %0 : vector<6x8x16xf32> to vector<48x16xf32>
    %c0_2 = arith.constant 0 : index
    %c0_3 = arith.constant 0 : index
    %2 = vector.load %arg3[%c0_2, %c0_3] : memref<16x512xf32, #tpu.memory_space<vmem>>, vector<16x512xf32>
    %cst = arith.constant dense<0.000000e+00> : vector<48x512xf32>
    %3 = tpu.matmul %1, %2, %cst {dimension_numbers = #tpu.dot_dimension_numbers<[1], [0], [0], [1], [0, 0, 1, 1], [], []>} : vector<48x16xf32>, vector<16x512xf32>, vector<48x512xf32> -> vector<48x512xf32>
    %c0_4 = arith.constant 0 : index
    %c0_5 = arith.constant 0 : index
    %4 = vector.load %arg5[%c0_4, %c0_5] : memref<1x512xf32, #tpu.memory_space<vmem>>, vector<1x512xf32>
    %5 = vector.broadcast %4 : vector<1x512xf32> to vector<48x512xf32>
    %6 = arith.addf %3, %5 : vector<48x512xf32>
    %c0_6 = arith.constant 0 : index
    %c0_7 = arith.constant 0 : index
    %7 = vector.load %arg12[%c0_6, %c0_7] : memref<48x512xf32, #tpu.memory_space<vmem>>, vector<48x512xf32>
    tpu.vector_store %arg12[%c0_6, %c0_7], %6 {strides = array<i32>} : memref<48x512xf32, #tpu.memory_space<vmem>>, vector<48x512xf32>,
    %c0_8 = arith.constant 0 : index
    %c0_9 = arith.constant 0 : index
    %8 = vector.load %arg2[%c0_8, %c0_9] : memref<8x16xf32, #tpu.memory_space<vmem>>, vector<8x16xf32>
    %c0_10 = arith.constant 0 : index
    %c0_11 = arith.constant 0 : index
    %9 = vector.load %arg6[%c0_10, %c0_11] : memref<16x128xf32, #tpu.memory_space<vmem>>, vector<16x128xf32>
    %cst_12 = arith.constant dense<0.000000e+00> : vector<8x128xf32>
    %10 = tpu.matmul %8, %9, %cst_12 {dimension_numbers = #tpu.dot_dimension_numbers<[1], [0], [0], [1], [0, 0, 1, 1], [], []>} : vector<8x16xf32>, vector<16x128xf32>, vector<8x128xf32> -> vector<8x128xf32>
    %c0_13 = arith.constant 0 : index
    %c0_14 = arith.constant 0 : index
    %11 = vector.load %arg7[%c0_13, %c0_14] : memref<1x128xf32, #tpu.memory_space<vmem>>, vector<1x128xf32>
    %12 = vector.broadcast %11 : vector<1x128xf32> to vector<8x128xf32>
    %13 = arith.addf %10, %12 : vector<8x128xf32>
    %c0_15 = arith.constant 0 : index
    %c0_16 = arith.constant 0 : index
    %14 = vector.load %arg9[%c0_15, %c0_16] : memref<128x128xf32, #tpu.memory_space<vmem>>, vector<128x128xf32>
    %cst_17 = arith.constant dense<0.000000e+00> : vector<8x128xf32>
    %15 = tpu.matmul %13, %14, %cst_17 {dimension_numbers = #tpu.dot_dimension_numbers<[1], [0], [0], [1], [0, 0, 1, 1], [], []>} : vector<8x128xf32>, vector<128x128xf32>, vector<8x128xf32> -> vector<8x128xf32>
    %c0_18 = arith.constant 0 : index
    %c0_19 = arith.constant 0 : index
    %16 = vector.load %arg10[%c0_18, %c0_19] : memref<1x128xf32, #tpu.memory_space<vmem>>, vector<1x128xf32>
    %17 = vector.broadcast %16 : vector<1x128xf32> to vector<8x128xf32>
    %18 = arith.addf %15, %17 : vector<8x128xf32>
    %cst_20 = arith.constant 0.000000e+00 : f32
    %19 = vector.broadcast %cst_20 : f32 to vector<8x128xf32>
    %cst_21 = arith.constant 0.000000e+00 : f32
    %20 = vector.broadcast %cst_21 : f32 to vector<8x128xf32>
    %c0_22 = arith.constant 0 : index
    %c0_23 = arith.constant 0 : index
    %21 = vector.load %arg12[%c0_22, %c0_23] : memref<48x512xf32, #tpu.memory_space<vmem>>, vector<8x512xf32>
    %c0_24 = arith.constant 0 : index
    %c0_25 = arith.constant 0 : index
    %22 = vector.load %arg4[%c0_24, %c0_25] : memref<128x512xf32, #tpu.memory_space<vmem>>, vector<128x512xf32>
    %cst_26 = arith.constant dense<0.000000e+00> : vector<8x512xf32>
    %23 = tpu.matmul %19, %22, %cst_26 {dimension_numbers = #tpu.dot_dimension_numbers<[1], [0], [0], [1], [0, 0, 1, 1], [], []>} : vector<8x128xf32>, vector<128x512xf32>, vector<8x512xf32> -> vector<8x512xf32>
    %24 = arith.addf %21, %23 : vector<8x512xf32>
    %25 = vector.extract_strided_slice %24 {offsets = [0, 0], sizes = [8, 128], strides = [1, 1]} : vector<8x512xf32> to vector<8x128xf32>
    %cst_27 = arith.constant 5.000000e-01 : f32
    %26 = vector.broadcast %cst_27 : f32 to vector<8x128xf32>
    %27 = arith.mulf %26, %25 : vector<8x128xf32>
    %28 = math.tanh %27 : vector<8x128xf32>
    %cst_28 = arith.constant 1.000000e+00 : f32
    %29 = vector.broadcast %cst_28 : f32 to vector<8x128xf32>
    %30 = arith.addf %28, %29 : vector<8x128xf32>
    %cst_29 = arith.constant 5.000000e-01 : f32
    %31 = vector.broadcast %cst_29 : f32 to vector<8x128xf32>
    %32 = arith.mulf %31, %30 : vector<8x128xf32>
    %33 = vector.extract_strided_slice %24 {offsets = [0, 128], sizes = [8, 128], strides = [1, 1]} : vector<8x512xf32> to vector<8x128xf32>
    %cst_30 = arith.constant 5.000000e-01 : f32
    %34 = vector.broadcast %cst_30 : f32 to vector<8x128xf32>
    %35 = arith.mulf %34, %33 : vector<8x128xf32>
    %36 = math.tanh %35 : vector<8x128xf32>
    %cst_31 = arith.constant 1.000000e+00 : f32
    %37 = vector.broadcast %cst_31 : f32 to vector<8x128xf32>
    %38 = arith.addf %36, %37 : vector<8x128xf32>
    %cst_32 = arith.constant 5.000000e-01 : f32
    %39 = vector.broadcast %cst_32 : f32 to vector<8x128xf32>
    %40 = arith.mulf %39, %38 : vector<8x128xf32>
    %41 = vector.extract_strided_slice %24 {offsets = [0, 256], sizes = [8, 128], strides = [1, 1]} : vector<8x512xf32> to vector<8x128xf32>
    %42 = math.tanh %41 : vector<8x128xf32>
    %43 = vector.extract_strided_slice %24 {offsets = [0, 384], sizes = [8, 128], strides = [1, 1]} : vector<8x512xf32> to vector<8x128xf32>
    %cst_33 = arith.constant 5.000000e-01 : f32
    %44 = vector.broadcast %cst_33 : f32 to vector<8x128xf32>
    %45 = arith.mulf %44, %43 : vector<8x128xf32>
    %46 = math.tanh %45 : vector<8x128xf32>
    %cst_34 = arith.constant 1.000000e+00 : f32
    %47 = vector.broadcast %cst_34 : f32 to vector<8x128xf32>
    %48 = arith.addf %46, %47 : vector<8x128xf32>
    %cst_35 = arith.constant 5.000000e-01 : f32
    %49 = vector.broadcast %cst_35 : f32 to vector<8x128xf32>
    %50 = arith.mulf %49, %48 : vector<8x128xf32>
    %51 = arith.mulf %40, %20 : vector<8x128xf32>
    %52 = arith.mulf %32, %42 : vector<8x128xf32>
    %53 = arith.addf %51, %52 : vector<8x128xf32>
    %54 = math.tanh %53 : vector<8x128xf32>
    %55 = arith.mulf %50, %54 : vector<8x128xf32>
    %c0_36 = arith.constant 0 : index
    %c0_37 = arith.constant 0 : index
    %56 = vector.load %arg8[%c0_36, %c0_37] : memref<128x128xf32, #tpu.memory_space<vmem>>, vector<128x128xf32>
    %cst_38 = arith.constant dense<0.000000e+00> : vector<8x128xf32>
    %57 = tpu.matmul %55, %56, %cst_38 {dimension_numbers = #tpu.dot_dimension_numbers<[1], [0], [0], [1], [0, 0, 1, 1], [], []>} : vector<8x128xf32>, vector<128x128xf32>, vector<8x128xf32> -> vector<8x128xf32>
    %58 = arith.addf %57, %18 : vector<8x128xf32>
    %cst_39 = arith.constant 0.000000e+00 : f32
    %59 = vector.broadcast %cst_39 : f32 to vector<8x128xf32>
    %60 = arith.maximumf %58, %59 : vector<8x128xf32>
    %c0_40 = arith.constant 0 : index
    %c0_41 = arith.constant 0 : index
    %61 = vector.load %arg11[%c0_40, %c0_41] : memref<8x768xf32, #tpu.memory_space<vmem>>, vector<8x128xf32>
    tpu.vector_store %arg11[%c0_40, %c0_41], %60 {strides = array<i32>} : memref<8x768xf32, #tpu.memory_space<vmem>>, vector<8x128xf32>,
    %c8 = arith.constant 8 : index
    %c0_42 = arith.constant 0 : index
    %62 = vector.load %arg12[%c8, %c0_42] : memref<48x512xf32, #tpu.memory_space<vmem>>, vector<8x512xf32>
    %c0_43 = arith.constant 0 : index
    %c0_44 = arith.constant 0 : index
    %63 = vector.load %arg4[%c0_43, %c0_44] : memref<128x512xf32, #tpu.memory_space<vmem>>, vector<128x512xf32>
    %cst_45 = arith.constant dense<0.000000e+00> : vector<8x512xf32>
    %64 = tpu.matmul %55, %63, %cst_45 {dimension_numbers = #tpu.dot_dimension_numbers<[1], [0], [0], [1], [0, 0, 1, 1], [], []>} : vector<8x128xf32>, vector<128x512xf32>, vector<8x512xf32> -> vector<8x512xf32>
    %65 = arith.addf %62, %64 : vector<8x512xf32>
    %66 = vector.extract_strided_slice %65 {offsets = [0, 0], sizes = [8, 128], strides = [1, 1]} : vector<8x512xf32> to vector<8x128xf32>
    %cst_46 = arith.constant 5.000000e-01 : f32
    %67 = vector.broadcast %cst_46 : f32 to vector<8x128xf32>
    %68 = arith.mulf %67, %66 : vector<8x128xf32>
    %69 = math.tanh %68 : vector<8x128xf32>
    %cst_47 = arith.constant 1.000000e+00 : f32
    %70 = vector.broadcast %cst_47 : f32 to vector<8x128xf32>
    %71 = arith.addf %69, %70 : vector<8x128xf32>
    %cst_48 = arith.constant 5.000000e-01 : f32
    %72 = vector.broadcast %cst_48 : f32 to vector<8x128xf32>
    %73 = arith.mulf %72, %71 : vector<8x128xf32>
    %74 = vector.extract_strided_slice %65 {offsets = [0, 128], sizes = [8, 128], strides = [1, 1]} : vector<8x512xf32> to vector<8x128xf32>
    %cst_49 = arith.constant 5.000000e-01 : f32
    %75 = vector.broadcast %cst_49 : f32 to vector<8x128xf32>
    %76 = arith.mulf %75, %74 : vector<8x128xf32>
    %77 = math.tanh %76 : vector<8x128xf32>
    %cst_50 = arith.constant 1.000000e+00 : f32
    %78 = vector.broadcast %cst_50 : f32 to vector<8x128xf32>
    %79 = arith.addf %77, %78 : vector<8x128xf32>
    %cst_51 = arith.constant 5.000000e-01 : f32
    %80 = vector.broadcast %cst_51 : f32 to vector<8x128xf32>
    %81 = arith.mulf %80, %79 : vector<8x128xf32>
    %82 = vector.extract_strided_slice %65 {offsets = [0, 256], sizes = [8, 128], strides = [1, 1]} : vector<8x512xf32> to vector<8x128xf32>
    %83 = math.tanh %82 : vector<8x128xf32>
    %84 = vector.extract_strided_slice %65 {offsets = [0, 384], sizes = [8, 128], strides = [1, 1]} : vector<8x512xf32> to vector<8x128xf32>
    %cst_52 = arith.constant 5.000000e-01 : f32
    %85 = vector.broadcast %cst_52 : f32 to vector<8x128xf32>
    %86 = arith.mulf %85, %84 : vector<8x128xf32>
    %87 = math.tanh %86 : vector<8x128xf32>
    %cst_53 = arith.constant 1.000000e+00 : f32
    %88 = vector.broadcast %cst_53 : f32 to vector<8x128xf32>
    %89 = arith.addf %87, %88 : vector<8x128xf32>
    %cst_54 = arith.constant 5.000000e-01 : f32
    %90 = vector.broadcast %cst_54 : f32 to vector<8x128xf32>
    %91 = arith.mulf %90, %89 : vector<8x128xf32>
    %92 = arith.mulf %81, %53 : vector<8x128xf32>
    %93 = arith.mulf %73, %83 : vector<8x128xf32>
    %94 = arith.addf %92, %93 : vector<8x128xf32>
    %95 = math.tanh %94 : vector<8x128xf32>
    %96 = arith.mulf %91, %95 : vector<8x128xf32>
    %c0_55 = arith.constant 0 : index
    %c0_56 = arith.constant 0 : index
    %97 = vector.load %arg8[%c0_55, %c0_56] : memref<128x128xf32, #tpu.memory_space<vmem>>, vector<128x128xf32>
    %cst_57 = arith.constant dense<0.000000e+00> : vector<8x128xf32>
    %98 = tpu.matmul %96, %97, %cst_57 {dimension_numbers = #tpu.dot_dimension_numbers<[1], [0], [0], [1], [0, 0, 1, 1], [], []>} : vector<8x128xf32>, vector<128x128xf32>, vector<8x128xf32> -> vector<8x128xf32>
    %99 = arith.addf %98, %18 : vector<8x128xf32>
    %cst_58 = arith.constant 0.000000e+00 : f32
    %100 = vector.broadcast %cst_58 : f32 to vector<8x128xf32>
    %101 = arith.maximumf %99, %100 : vector<8x128xf32>
    %c0_59 = arith.constant 0 : index
    %c128 = arith.constant 128 : index
    %102 = vector.load %arg11[%c0_59, %c128] : memref<8x768xf32, #tpu.memory_space<vmem>>, vector<8x128xf32>
    tpu.vector_store %arg11[%c0_59, %c128], %101 {strides = array<i32>} : memref<8x768xf32, #tpu.memory_space<vmem>>, vector<8x128xf32>,
    %c16 = arith.constant 16 : index
    %c0_60 = arith.constant 0 : index
    %103 = vector.load %arg12[%c16, %c0_60] : memref<48x512xf32, #tpu.memory_space<vmem>>, vector<8x512xf32>
    %c0_61 = arith.constant 0 : index
    %c0_62 = arith.constant 0 : index
    %104 = vector.load %arg4[%c0_61, %c0_62] : memref<128x512xf32, #tpu.memory_space<vmem>>, vector<128x512xf32>
    %cst_63 = arith.constant dense<0.000000e+00> : vector<8x512xf32>
    %105 = tpu.matmul %96, %104, %cst_63 {dimension_numbers = #tpu.dot_dimension_numbers<[1], [0], [0], [1], [0, 0, 1, 1], [], []>} : vector<8x128xf32>, vector<128x512xf32>, vector<8x512xf32> -> vector<8x512xf32>
    %106 = arith.addf %103, %105 : vector<8x512xf32>
    %107 = vector.extract_strided_slice %106 {offsets = [0, 0], sizes = [8, 128], strides = [1, 1]} : vector<8x512xf32> to vector<8x128xf32>
    %cst_64 = arith.constant 5.000000e-01 : f32
    %108 = vector.broadcast %cst_64 : f32 to vector<8x128xf32>
    %109 = arith.mulf %108, %107 : vector<8x128xf32>
    %110 = math.tanh %109 : vector<8x128xf32>
    %cst_65 = arith.constant 1.000000e+00 : f32
    %111 = vector.broadcast %cst_65 : f32 to vector<8x128xf32>
    %112 = arith.addf %110, %111 : vector<8x128xf32>
    %cst_66 = arith.constant 5.000000e-01 : f32
    %113 = vector.broadcast %cst_66 : f32 to vector<8x128xf32>
    %114 = arith.mulf %113, %112 : vector<8x128xf32>
    %115 = vector.extract_strided_slice %106 {offsets = [0, 128], sizes = [8, 128], strides = [1, 1]} : vector<8x512xf32> to vector<8x128xf32>
    %cst_67 = arith.constant 5.000000e-01 : f32
    %116 = vector.broadcast %cst_67 : f32 to vector<8x128xf32>
    %117 = arith.mulf %116, %115 : vector<8x128xf32>
    %118 = math.tanh %117 : vector<8x128xf32>
    %cst_68 = arith.constant 1.000000e+00 : f32
    %119 = vector.broadcast %cst_68 : f32 to vector<8x128xf32>
    %120 = arith.addf %118, %119 : vector<8x128xf32>
    %cst_69 = arith.constant 5.000000e-01 : f32
    %121 = vector.broadcast %cst_69 : f32 to vector<8x128xf32>
    %122 = arith.mulf %121, %120 : vector<8x128xf32>
    %123 = vector.extract_strided_slice %106 {offsets = [0, 256], sizes = [8, 128], strides = [1, 1]} : vector<8x512xf32> to vector<8x128xf32>
    %124 = math.tanh %123 : vector<8x128xf32>
    %125 = vector.extract_strided_slice %106 {offsets = [0, 384], sizes = [8, 128], strides = [1, 1]} : vector<8x512xf32> to vector<8x128xf32>
    %cst_70 = arith.constant 5.000000e-01 : f32
    %126 = vector.broadcast %cst_70 : f32 to vector<8x128xf32>
    %127 = arith.mulf %126, %125 : vector<8x128xf32>
    %128 = math.tanh %127 : vector<8x128xf32>
    %cst_71 = arith.constant 1.000000e+00 : f32
    %129 = vector.broadcast %cst_71 : f32 to vector<8x128xf32>
    %130 = arith.addf %128, %129 : vector<8x128xf32>
    %cst_72 = arith.constant 5.000000e-01 : f32
    %131 = vector.broadcast %cst_72 : f32 to vector<8x128xf32>
    %132 = arith.mulf %131, %130 : vector<8x128xf32>
    %133 = arith.mulf %122, %94 : vector<8x128xf32>
    %134 = arith.mulf %114, %124 : vector<8x128xf32>
    %135 = arith.addf %133, %134 : vector<8x128xf32>
    %136 = math.tanh %135 : vector<8x128xf32>
    %137 = arith.mulf %132, %136 : vector<8x128xf32>
    %c0_73 = arith.constant 0 : index
    %c0_74 = arith.constant 0 : index
    %138 = vector.load %arg8[%c0_73, %c0_74] : memref<128x128xf32, #tpu.memory_space<vmem>>, vector<128x128xf32>
    %cst_75 = arith.constant dense<0.000000e+00> : vector<8x128xf32>
    %139 = tpu.matmul %137, %138, %cst_75 {dimension_numbers = #tpu.dot_dimension_numbers<[1], [0], [0], [1], [0, 0, 1, 1], [], []>} : vector<8x128xf32>, vector<128x128xf32>, vector<8x128xf32> -> vector<8x128xf32>
    %140 = arith.addf %139, %18 : vector<8x128xf32>
    %cst_76 = arith.constant 0.000000e+00 : f32
    %141 = vector.broadcast %cst_76 : f32 to vector<8x128xf32>
    %142 = arith.maximumf %140, %141 : vector<8x128xf32>
    %c0_77 = arith.constant 0 : index
    %c256 = arith.constant 256 : index
    %143 = vector.load %arg11[%c0_77, %c256] : memref<8x768xf32, #tpu.memory_space<vmem>>, vector<8x128xf32>
    tpu.vector_store %arg11[%c0_77, %c256], %142 {strides = array<i32>} : memref<8x768xf32, #tpu.memory_space<vmem>>, vector<8x128xf32>,
    %c24 = arith.constant 24 : index
    %c0_78 = arith.constant 0 : index
    %144 = vector.load %arg12[%c24, %c0_78] : memref<48x512xf32, #tpu.memory_space<vmem>>, vector<8x512xf32>
    %c0_79 = arith.constant 0 : index
    %c0_80 = arith.constant 0 : index
    %145 = vector.load %arg4[%c0_79, %c0_80] : memref<128x512xf32, #tpu.memory_space<vmem>>, vector<128x512xf32>
    %cst_81 = arith.constant dense<0.000000e+00> : vector<8x512xf32>
    %146 = tpu.matmul %137, %145, %cst_81 {dimension_numbers = #tpu.dot_dimension_numbers<[1], [0], [0], [1], [0, 0, 1, 1], [], []>} : vector<8x128xf32>, vector<128x512xf32>, vector<8x512xf32> -> vector<8x512xf32>
    %147 = arith.addf %144, %146 : vector<8x512xf32>
    %148 = vector.extract_strided_slice %147 {offsets = [0, 0], sizes = [8, 128], strides = [1, 1]} : vector<8x512xf32> to vector<8x128xf32>
    %cst_82 = arith.constant 5.000000e-01 : f32
    %149 = vector.broadcast %cst_82 : f32 to vector<8x128xf32>
    %150 = arith.mulf %149, %148 : vector<8x128xf32>
    %151 = math.tanh %150 : vector<8x128xf32>
    %cst_83 = arith.constant 1.000000e+00 : f32
    %152 = vector.broadcast %cst_83 : f32 to vector<8x128xf32>
    %153 = arith.addf %151, %152 : vector<8x128xf32>
    %cst_84 = arith.constant 5.000000e-01 : f32
    %154 = vector.broadcast %cst_84 : f32 to vector<8x128xf32>
    %155 = arith.mulf %154, %153 : vector<8x128xf32>
    %156 = vector.extract_strided_slice %147 {offsets = [0, 128], sizes = [8, 128], strides = [1, 1]} : vector<8x512xf32> to vector<8x128xf32>
    %cst_85 = arith.constant 5.000000e-01 : f32
    %157 = vector.broadcast %cst_85 : f32 to vector<8x128xf32>
    %158 = arith.mulf %157, %156 : vector<8x128xf32>
    %159 = math.tanh %158 : vector<8x128xf32>
    %cst_86 = arith.constant 1.000000e+00 : f32
    %160 = vector.broadcast %cst_86 : f32 to vector<8x128xf32>
    %161 = arith.addf %159, %160 : vector<8x128xf32>
    %cst_87 = arith.constant 5.000000e-01 : f32
    %162 = vector.broadcast %cst_87 : f32 to vector<8x128xf32>
    %163 = arith.mulf %162, %161 : vector<8x128xf32>
    %164 = vector.extract_strided_slice %147 {offsets = [0, 256], sizes = [8, 128], strides = [1, 1]} : vector<8x512xf32> to vector<8x128xf32>
    %165 = math.tanh %164 : vector<8x128xf32>
    %166 = vector.extract_strided_slice %147 {offsets = [0, 384], sizes = [8, 128], strides = [1, 1]} : vector<8x512xf32> to vector<8x128xf32>
    %cst_88 = arith.constant 5.000000e-01 : f32
    %167 = vector.broadcast %cst_88 : f32 to vector<8x128xf32>
    %168 = arith.mulf %167, %166 : vector<8x128xf32>
    %169 = math.tanh %168 : vector<8x128xf32>
    %cst_89 = arith.constant 1.000000e+00 : f32
    %170 = vector.broadcast %cst_89 : f32 to vector<8x128xf32>
    %171 = arith.addf %169, %170 : vector<8x128xf32>
    %cst_90 = arith.constant 5.000000e-01 : f32
    %172 = vector.broadcast %cst_90 : f32 to vector<8x128xf32>
    %173 = arith.mulf %172, %171 : vector<8x128xf32>
    %174 = arith.mulf %163, %135 : vector<8x128xf32>
    %175 = arith.mulf %155, %165 : vector<8x128xf32>
    %176 = arith.addf %174, %175 : vector<8x128xf32>
    %177 = math.tanh %176 : vector<8x128xf32>
    %178 = arith.mulf %173, %177 : vector<8x128xf32>
    %c0_91 = arith.constant 0 : index
    %c0_92 = arith.constant 0 : index
    %179 = vector.load %arg8[%c0_91, %c0_92] : memref<128x128xf32, #tpu.memory_space<vmem>>, vector<128x128xf32>
    %cst_93 = arith.constant dense<0.000000e+00> : vector<8x128xf32>
    %180 = tpu.matmul %178, %179, %cst_93 {dimension_numbers = #tpu.dot_dimension_numbers<[1], [0], [0], [1], [0, 0, 1, 1], [], []>} : vector<8x128xf32>, vector<128x128xf32>, vector<8x128xf32> -> vector<8x128xf32>
    %181 = arith.addf %180, %18 : vector<8x128xf32>
    %cst_94 = arith.constant 0.000000e+00 : f32
    %182 = vector.broadcast %cst_94 : f32 to vector<8x128xf32>
    %183 = arith.maximumf %181, %182 : vector<8x128xf32>
    %c0_95 = arith.constant 0 : index
    %c384 = arith.constant 384 : index
    %184 = vector.load %arg11[%c0_95, %c384] : memref<8x768xf32, #tpu.memory_space<vmem>>, vector<8x128xf32>
    tpu.vector_store %arg11[%c0_95, %c384], %183 {strides = array<i32>} : memref<8x768xf32, #tpu.memory_space<vmem>>, vector<8x128xf32>,
    %c32 = arith.constant 32 : index
    %c0_96 = arith.constant 0 : index
    %185 = vector.load %arg12[%c32, %c0_96] : memref<48x512xf32, #tpu.memory_space<vmem>>, vector<8x512xf32>
    %c0_97 = arith.constant 0 : index
    %c0_98 = arith.constant 0 : index
    %186 = vector.load %arg4[%c0_97, %c0_98] : memref<128x512xf32, #tpu.memory_space<vmem>>, vector<128x512xf32>
    %cst_99 = arith.constant dense<0.000000e+00> : vector<8x512xf32>
    %187 = tpu.matmul %178, %186, %cst_99 {dimension_numbers = #tpu.dot_dimension_numbers<[1], [0], [0], [1], [0, 0, 1, 1], [], []>} : vector<8x128xf32>, vector<128x512xf32>, vector<8x512xf32> -> vector<8x512xf32>
    %188 = arith.addf %185, %187 : vector<8x512xf32>
    %189 = vector.extract_strided_slice %188 {offsets = [0, 0], sizes = [8, 128], strides = [1, 1]} : vector<8x512xf32> to vector<8x128xf32>
    %cst_100 = arith.constant 5.000000e-01 : f32
    %190 = vector.broadcast %cst_100 : f32 to vector<8x128xf32>
    %191 = arith.mulf %190, %189 : vector<8x128xf32>
    %192 = math.tanh %191 : vector<8x128xf32>
    %cst_101 = arith.constant 1.000000e+00 : f32
    %193 = vector.broadcast %cst_101 : f32 to vector<8x128xf32>
    %194 = arith.addf %192, %193 : vector<8x128xf32>
    %cst_102 = arith.constant 5.000000e-01 : f32
    %195 = vector.broadcast %cst_102 : f32 to vector<8x128xf32>
    %196 = arith.mulf %195, %194 : vector<8x128xf32>
    %197 = vector.extract_strided_slice %188 {offsets = [0, 128], sizes = [8, 128], strides = [1, 1]} : vector<8x512xf32> to vector<8x128xf32>
    %cst_103 = arith.constant 5.000000e-01 : f32
    %198 = vector.broadcast %cst_103 : f32 to vector<8x128xf32>
    %199 = arith.mulf %198, %197 : vector<8x128xf32>
    %200 = math.tanh %199 : vector<8x128xf32>
    %cst_104 = arith.constant 1.000000e+00 : f32
    %201 = vector.broadcast %cst_104 : f32 to vector<8x128xf32>
    %202 = arith.addf %200, %201 : vector<8x128xf32>
    %cst_105 = arith.constant 5.000000e-01 : f32
    %203 = vector.broadcast %cst_105 : f32 to vector<8x128xf32>
    %204 = arith.mulf %203, %202 : vector<8x128xf32>
    %205 = vector.extract_strided_slice %188 {offsets = [0, 256], sizes = [8, 128], strides = [1, 1]} : vector<8x512xf32> to vector<8x128xf32>
    %206 = math.tanh %205 : vector<8x128xf32>
    %207 = vector.extract_strided_slice %188 {offsets = [0, 384], sizes = [8, 128], strides = [1, 1]} : vector<8x512xf32> to vector<8x128xf32>
    %cst_106 = arith.constant 5.000000e-01 : f32
    %208 = vector.broadcast %cst_106 : f32 to vector<8x128xf32>
    %209 = arith.mulf %208, %207 : vector<8x128xf32>
    %210 = math.tanh %209 : vector<8x128xf32>
    %cst_107 = arith.constant 1.000000e+00 : f32
    %211 = vector.broadcast %cst_107 : f32 to vector<8x128xf32>
    %212 = arith.addf %210, %211 : vector<8x128xf32>
    %cst_108 = arith.constant 5.000000e-01 : f32
    %213 = vector.broadcast %cst_108 : f32 to vector<8x128xf32>
    %214 = arith.mulf %213, %212 : vector<8x128xf32>
    %215 = arith.mulf %204, %176 : vector<8x128xf32>
    %216 = arith.mulf %196, %206 : vector<8x128xf32>
    %217 = arith.addf %215, %216 : vector<8x128xf32>
    %218 = math.tanh %217 : vector<8x128xf32>
    %219 = arith.mulf %214, %218 : vector<8x128xf32>
    %c0_109 = arith.constant 0 : index
    %c0_110 = arith.constant 0 : index
    %220 = vector.load %arg8[%c0_109, %c0_110] : memref<128x128xf32, #tpu.memory_space<vmem>>, vector<128x128xf32>
    %cst_111 = arith.constant dense<0.000000e+00> : vector<8x128xf32>
    %221 = tpu.matmul %219, %220, %cst_111 {dimension_numbers = #tpu.dot_dimension_numbers<[1], [0], [0], [1], [0, 0, 1, 1], [], []>} : vector<8x128xf32>, vector<128x128xf32>, vector<8x128xf32> -> vector<8x128xf32>
    %222 = arith.addf %221, %18 : vector<8x128xf32>
    %cst_112 = arith.constant 0.000000e+00 : f32
    %223 = vector.broadcast %cst_112 : f32 to vector<8x128xf32>
    %224 = arith.maximumf %222, %223 : vector<8x128xf32>
    %c0_113 = arith.constant 0 : index
    %c512 = arith.constant 512 : index
    %225 = vector.load %arg11[%c0_113, %c512] : memref<8x768xf32, #tpu.memory_space<vmem>>, vector<8x128xf32>
    tpu.vector_store %arg11[%c0_113, %c512], %224 {strides = array<i32>} : memref<8x768xf32, #tpu.memory_space<vmem>>, vector<8x128xf32>,
    %c40 = arith.constant 40 : index
    %c0_114 = arith.constant 0 : index
    %226 = vector.load %arg12[%c40, %c0_114] : memref<48x512xf32, #tpu.memory_space<vmem>>, vector<8x512xf32>
    %c0_115 = arith.constant 0 : index
    %c0_116 = arith.constant 0 : index
    %227 = vector.load %arg4[%c0_115, %c0_116] : memref<128x512xf32, #tpu.memory_space<vmem>>, vector<128x512xf32>
    %cst_117 = arith.constant dense<0.000000e+00> : vector<8x512xf32>
    %228 = tpu.matmul %219, %227, %cst_117 {dimension_numbers = #tpu.dot_dimension_numbers<[1], [0], [0], [1], [0, 0, 1, 1], [], []>} : vector<8x128xf32>, vector<128x512xf32>, vector<8x512xf32> -> vector<8x512xf32>
    %229 = arith.addf %226, %228 : vector<8x512xf32>
    %230 = vector.extract_strided_slice %229 {offsets = [0, 0], sizes = [8, 128], strides = [1, 1]} : vector<8x512xf32> to vector<8x128xf32>
    %cst_118 = arith.constant 5.000000e-01 : f32
    %231 = vector.broadcast %cst_118 : f32 to vector<8x128xf32>
    %232 = arith.mulf %231, %230 : vector<8x128xf32>
    %233 = math.tanh %232 : vector<8x128xf32>
    %cst_119 = arith.constant 1.000000e+00 : f32
    %234 = vector.broadcast %cst_119 : f32 to vector<8x128xf32>
    %235 = arith.addf %233, %234 : vector<8x128xf32>
    %cst_120 = arith.constant 5.000000e-01 : f32
    %236 = vector.broadcast %cst_120 : f32 to vector<8x128xf32>
    %237 = arith.mulf %236, %235 : vector<8x128xf32>
    %238 = vector.extract_strided_slice %229 {offsets = [0, 128], sizes = [8, 128], strides = [1, 1]} : vector<8x512xf32> to vector<8x128xf32>
    %cst_121 = arith.constant 5.000000e-01 : f32
    %239 = vector.broadcast %cst_121 : f32 to vector<8x128xf32>
    %240 = arith.mulf %239, %238 : vector<8x128xf32>
    %241 = math.tanh %240 : vector<8x128xf32>
    %cst_122 = arith.constant 1.000000e+00 : f32
    %242 = vector.broadcast %cst_122 : f32 to vector<8x128xf32>
    %243 = arith.addf %241, %242 : vector<8x128xf32>
    %cst_123 = arith.constant 5.000000e-01 : f32
    %244 = vector.broadcast %cst_123 : f32 to vector<8x128xf32>
    %245 = arith.mulf %244, %243 : vector<8x128xf32>
    %246 = vector.extract_strided_slice %229 {offsets = [0, 256], sizes = [8, 128], strides = [1, 1]} : vector<8x512xf32> to vector<8x128xf32>
    %247 = math.tanh %246 : vector<8x128xf32>
    %248 = vector.extract_strided_slice %229 {offsets = [0, 384], sizes = [8, 128], strides = [1, 1]} : vector<8x512xf32> to vector<8x128xf32>
    %cst_124 = arith.constant 5.000000e-01 : f32
    %249 = vector.broadcast %cst_124 : f32 to vector<8x128xf32>
    %250 = arith.mulf %249, %248 : vector<8x128xf32>
    %251 = math.tanh %250 : vector<8x128xf32>
    %cst_125 = arith.constant 1.000000e+00 : f32
    %252 = vector.broadcast %cst_125 : f32 to vector<8x128xf32>
    %253 = arith.addf %251, %252 : vector<8x128xf32>
    %cst_126 = arith.constant 5.000000e-01 : f32
    %254 = vector.broadcast %cst_126 : f32 to vector<8x128xf32>
    %255 = arith.mulf %254, %253 : vector<8x128xf32>
    %256 = arith.mulf %245, %217 : vector<8x128xf32>
    %257 = arith.mulf %237, %247 : vector<8x128xf32>
    %258 = arith.addf %256, %257 : vector<8x128xf32>
    %259 = math.tanh %258 : vector<8x128xf32>
    %260 = arith.mulf %255, %259 : vector<8x128xf32>
    %c0_127 = arith.constant 0 : index
    %c0_128 = arith.constant 0 : index
    %261 = vector.load %arg8[%c0_127, %c0_128] : memref<128x128xf32, #tpu.memory_space<vmem>>, vector<128x128xf32>
    %cst_129 = arith.constant dense<0.000000e+00> : vector<8x128xf32>
    %262 = tpu.matmul %260, %261, %cst_129 {dimension_numbers = #tpu.dot_dimension_numbers<[1], [0], [0], [1], [0, 0, 1, 1], [], []>} : vector<8x128xf32>, vector<128x128xf32>, vector<8x128xf32> -> vector<8x128xf32>
    %263 = arith.addf %262, %18 : vector<8x128xf32>
    %cst_130 = arith.constant 0.000000e+00 : f32
    %264 = vector.broadcast %cst_130 : f32 to vector<8x128xf32>
    %265 = arith.maximumf %263, %264 : vector<8x128xf32>
    %c0_131 = arith.constant 0 : index
    %c640 = arith.constant 640 : index
    %266 = vector.load %arg11[%c0_131, %c640] : memref<8x768xf32, #tpu.memory_space<vmem>>, vector<8x128xf32>
    tpu.vector_store %arg11[%c0_131, %c640], %265 {strides = array<i32>} : memref<8x768xf32, #tpu.memory_space<vmem>>, vector<8x128xf32>,
    return
  }
  func.func @transform_0(%arg0: i32) -> (i32, i32, i32) {
    %c0_i32 = arith.constant 0 : i32
    %c0_i32_0 = arith.constant 0 : i32
    %c0_i32_1 = arith.constant 0 : i32
    return %c0_i32, %arg0, %c0_i32_0 : i32, i32, i32
  }
  func.func @transform_1(%arg0: i32) -> (i32, i32) {
    %c0_i32 = arith.constant 0 : i32
    %c0_i32_0 = arith.constant 0 : i32
    return %arg0, %c0_i32 : i32, i32
  }
  func.func @transform_2(%arg0: i32) -> (i32, i32) {
    %c0_i32 = arith.constant 0 : i32
    %c0_i32_0 = arith.constant 0 : i32
    %c0_i32_1 = arith.constant 0 : i32
    return %c0_i32, %c0_i32_0 : i32, i32
  }
  func.func @transform_3(%arg0: i32) -> (i32, i32) {
    %c0_i32 = arith.constant 0 : i32
    %c0_i32_0 = arith.constant 0 : i32
    %c0_i32_1 = arith.constant 0 : i32
    return %c0_i32, %c0_i32_0 : i32, i32
  }
  func.func @transform_4(%arg0: i32) -> (i32, i32) {
    %c0_i32 = arith.constant 0 : i32
    %c0_i32_0 = arith.constant 0 : i32
    %c0_i32_1 = arith.constant 0 : i32
    return %c0_i32, %c0_i32_0 : i32, i32
  }
  func.func @transform_5(%arg0: i32) -> (i32, i32) {
    %c0_i32 = arith.constant 0 : i32
    %c0_i32_0 = arith.constant 0 : i32
    %c0_i32_1 = arith.constant 0 : i32
    return %c0_i32, %c0_i32_0 : i32, i32
  }
  func.func @transform_6(%arg0: i32) -> (i32, i32) {
    %c0_i32 = arith.constant 0 : i32
    %c0_i32_0 = arith.constant 0 : i32
    %c0_i32_1 = arith.constant 0 : i32
    return %c0_i32, %c0_i32_0 : i32, i32
  }
  func.func @transform_7(%arg0: i32) -> (i32, i32) {
    %c0_i32 = arith.constant 0 : i32
    %c0_i32_0 = arith.constant 0 : i32
    %c0_i32_1 = arith.constant 0 : i32
    return %c0_i32, %c0_i32_0 : i32, i32
  }
  func.func @transform_8(%arg0: i32) -> (i32, i32) {
    %c0_i32 = arith.constant 0 : i32
    %c0_i32_0 = arith.constant 0 : i32
    %c0_i32_1 = arith.constant 0 : i32
    return %c0_i32, %c0_i32_0 : i32, i32
  }
  func.func @transform_9(%arg0: i32) -> (i32, i32) {
    %c0_i32 = arith.constant 0 : i32
    %c0_i32_0 = arith.constant 0 : i32
    %c0_i32_1 = arith.constant 0 : i32
    return %c0_i32, %c0_i32_0 : i32, i32
  }
  func.func @transform_10(%arg0: i32) -> (i32, i32) {
    %c0_i32 = arith.constant 0 : i32
    %c0_i32_0 = arith.constant 0 : i32
    return %arg0, %c0_i32 : i32, i32
  }
}

</mosaic_0001>

<llo_original>
// kernel: base_lstm_forward.1
$region0: #{base_lstm_forward.1}
  #allocation0 [shape = 'u32[]', space=smem, size = 0x4, offset = 0x4, fixed_abs, tag = 'smem constant byte address 0x4 - core index']
  #allocation1 [shape = 'u32[72,128]{1,0:T(1,128)}', space=vmem, size = 0x9000, scoped, tag = 'internal scratch']
  #allocation2 [shape = 'f32[48,512]{1,0:T(8,128)}', space=vmem, size = 0x18000, scoped, tag = 'scratch operand']
  %s0 = inlined_call_operand.vmem [shape: f32[6,8,16], index: 0, kind: input, shape index: {}]
  %s1 = inlined_call_operand.vmem [shape: f32[8,16], index: 1, kind: input, shape index: {}]
  %s2 = inlined_call_operand.vmem [shape: f32[16,512], index: 2, kind: input, shape index: {}]
  %s3 = inlined_call_operand.hbm [shape: f32[128,512], index: 3, kind: input, shape index: {}]
  %s4 = inlined_call_operand.hbm [shape: f32[1,512], index: 4, kind: input, shape index: {}]
  %s5 = inlined_call_operand.vmem [shape: f32[16,128], index: 5, kind: input, shape index: {}]
  %s6 = inlined_call_operand.vmem [shape: f32[1,128], index: 6, kind: input, shape index: {}]
  %s7 = inlined_call_operand.hbm [shape: f32[128,128], index: 7, kind: input, shape index: {}]
  %s8 = inlined_call_operand.hbm [shape: f32[128,128], index: 8, kind: input, shape index: {}]
  %s9 = inlined_call_operand.hbm [shape: f32[1,128], index: 9, kind: input, shape index: {}]
  %s10 = inlined_call_operand.vmem [shape: f32[8,768], index: 10, kind: output, shape index: {}]
  %s11 = sld [smem:[#allocation0]]
  $region70: #{base_lstm_forward.1} parent=0
    _
  %s13 = ssub.s32 1, %s11
  %s14 = scalar_select 0, %s13, %s11
  $region1: #{base_lstm_forward.1} parent=0
    #allocation3 [shape = 'u8[262144]{0}', space=vmem, size = 0x40000, scoped, tag = 'input window, operand 3, single buffered']
    #allocation4 [shape = 's32[1]{0}', space=sflag, size = 0x4, scoped, tag = 'scoped memory for base_lstm_forward.1']
    #allocation5 [shape = 'u8[2048]{0}', space=vmem, size = 0x800, scoped, tag = 'input window, operand 4, single buffered']
    #allocation6 [shape = 's32[1]{0}', space=sflag, size = 0x4, scoped, tag = 'scoped memory for base_lstm_forward.1']
    #allocation7 [shape = 'u8[65536]{0}', space=vmem, size = 0x10000, scoped, tag = 'input window, operand 7, single buffered']
    #allocation8 [shape = 'u8[65536]{0}', space=vmem, size = 0x10000, scoped, tag = 'input window, operand 8, single buffered']
    #allocation9 [shape = 's32[1]{0}', space=sflag, size = 0x4, scoped, tag = 'scoped memory for base_lstm_forward.1']
    #allocation10 [shape = 'u8[512]{0}', space=vmem, size = 0x400, scoped, tag = 'input window, operand 9, single buffered']
    %15 = vsyncpa [#allocation4], 0
    %16 = vsyncpa [#allocation6], 0
    %17 = vsyncpa [#allocation9], 0
    // Predicated region
    $region2: #{base_lstm_forward.1} parent=1 // pred_check
      _
    $region3: #{base_lstm_forward.1} parent=1 // pred_check_branch
      %19 = sbr.rel (0) target = $region5
    $region4: #{base_lstm_forward.1} parent=1 // pred_region
      _
    $region5: #{base_lstm_forward.1} parent=1 // pred_fallthru
      _
    // Predicated region
    $region6: #{base_lstm_forward.1} parent=1 // pred_check
      _
    $region7: #{base_lstm_forward.1} parent=1 // pred_check_branch
      %21 = sbr.rel (0) target = $region9
    $region8: #{base_lstm_forward.1} parent=1 // pred_region
      _
    $region9: #{base_lstm_forward.1} parent=1 // pred_fallthru
      _
    // Predicated region
    $region10: #{base_lstm_forward.1} parent=1 // pred_check
      _
    $region11: #{base_lstm_forward.1} parent=1 // pred_check_branch
      %23 = sbr.rel (0) target = $region13
    $region12: #{base_lstm_forward.1} parent=1 // pred_region
      _
    $region13: #{base_lstm_forward.1} parent=1 // pred_fallthru
      _
    // Predicated region
    $region14: #{base_lstm_forward.1} parent=1 // pred_check
      _
    $region15: #{base_lstm_forward.1} parent=1 // pred_check_branch
      %25 = sbr.rel (0) target = $region17
    $region16: #{base_lstm_forward.1} parent=1 // pred_region
      %27 = vsyncadd [#allocation4], 0
      %s28 = sshll.u32 %s3, 4
      %s29 = int_to_ptr.hbm [resolvable:$true] %s28
      %s30 = sshll.u32 [#allocation3], 4
      %s31 = int_to_ptr.vmem [resolvable:$true] %s30
      %36 = dma.hbm_to_vmem [thread:$0]  %s29, 8192, %s31, [#allocation4], 512, 512, 32
    $region17: #{base_lstm_forward.1} parent=1 // pred_fallthru
      _
    // Predicated region
    $region18: #{base_lstm_forward.1} parent=1 // pred_check
      _
    $region19: #{base_lstm_forward.1} parent=1 // pred_check_branch
      %38 = sbr.rel (0) target = $region21
    $region20: #{base_lstm_forward.1} parent=1 // pred_region
      %40 = vsyncadd [#allocation6], 0
      %s42 = sshll.u32 %s4, 4
      %s43 = int_to_ptr.hbm [resolvable:$true] %s42
      %s44 = sshll.u32 [#allocation5], 4
      %s45 = int_to_ptr.vmem [resolvable:$true] %s44
      %47 = dma.hbm_to_vmem [thread:$0]  %s43, 64, %s45, [#allocation6]
    $region21: #{base_lstm_forward.1} parent=1 // pred_fallthru
      _
    // Predicated region
    $region22: #{base_lstm_forward.1} parent=1 // pred_check
      _
    $region23: #{base_lstm_forward.1} parent=1 // pred_check_branch
      %49 = sbr.rel (0) target = $region25
    $region24: #{base_lstm_forward.1} parent=1 // pred_region
      _
    $region25: #{base_lstm_forward.1} parent=1 // pred_fallthru
      _
    // Predicated region
    $region26: #{base_lstm_forward.1} parent=1 // pred_check
      _
    $region27: #{base_lstm_forward.1} parent=1 // pred_check_branch
      %51 = sbr.rel (0) target = $region29
    $region28: #{base_lstm_forward.1} parent=1 // pred_region
      _
    $region29: #{base_lstm_forward.1} parent=1 // pred_fallthru
      _
    // Predicated region
    $region30: #{base_lstm_forward.1} parent=1 // pred_check
      _
    $region31: #{base_lstm_forward.1} parent=1 // pred_check_branch
      %53 = sbr.rel (0) target = $region33
    $region32: #{base_lstm_forward.1} parent=1 // pred_region
      %55 = vsyncadd [#allocation6], 0
      %s56 = sshll.u32 %s7, 4
      %s57 = int_to_ptr.hbm [resolvable:$true] %s56
      %s58 = sshll.u32 [#allocation7], 4
      %s59 = int_to_ptr.vmem [resolvable:$true] %s58
      %64 = dma.hbm_to_vmem [thread:$0]  %s57, 2048, %s59, [#allocation6], 128, 128, 8
    $region33: #{base_lstm_forward.1} parent=1 // pred_fallthru
      _
    // Predicated region
    $region34: #{base_lstm_forward.1} parent=1 // pred_check
      _
    $region35: #{base_lstm_forward.1} parent=1 // pred_check_branch
      %66 = sbr.rel (0) target = $region37
    $region36: #{base_lstm_forward.1} parent=1 // pred_region
      %68 = vsyncadd [#allocation9], 0
      %s69 = sshll.u32 %s8, 4
      %s70 = int_to_ptr.hbm [resolvable:$true] %s69
      %s71 = sshll.u32 [#allocation8], 4
      %s72 = int_to_ptr.vmem [resolvable:$true] %s71
      %77 = dma.hbm_to_vmem [thread:$0]  %s70, 2048, %s72, [#allocation9], 128, 128, 8
    $region37: #{base_lstm_forward.1} parent=1 // pred_fallthru
      _
    // Predicated region
    $region38: #{base_lstm_forward.1} parent=1 // pred_check
      _
    $region39: #{base_lstm_forward.1} parent=1 // pred_check_branch
      %79 = sbr.rel (0) target = $region41
    $region40: #{base_lstm_forward.1} parent=1 // pred_region
      %81 = vsyncadd [#allocation9], 0
      %s83 = sshll.u32 %s9, 4
      %s84 = int_to_ptr.hbm [resolvable:$true] %s83
      %s85 = sshll.u32 [#allocation10], 4
      %s86 = int_to_ptr.vmem [resolvable:$true] %s85
      %88 = dma.hbm_to_vmem [thread:$0]  %s84, 16, %s86, [#allocation9]
    $region41: #{base_lstm_forward.1} parent=1 // pred_fallthru
      _
    // Predicated region
    $region42: #{base_lstm_forward.1} parent=1 // pred_check
      _
    $region43: #{base_lstm_forward.1} parent=1 // pred_check_branch
      %90 = sbr.rel (0) target = $region45
    $region44: #{base_lstm_forward.1} parent=1 // pred_region
      %92 = dma.done [#allocation4], 8192
    $region45: #{base_lstm_forward.1} parent=1 // pred_fallthru
      _
    // Predicated region
    $region46: #{base_lstm_forward.1} parent=1 // pred_check
      _
    $region47: #{base_lstm_forward.1} parent=1 // pred_check_branch
      %94 = sbr.rel (0) target = $region49
    $region48: #{base_lstm_forward.1} parent=1 // pred_region
      %96 = dma.done [#allocation6], 64
    $region49: #{base_lstm_forward.1} parent=1 // pred_fallthru
      _
    // Predicated region
    $region50: #{base_lstm_forward.1} parent=1 // pred_check
      _
    $region51: #{base_lstm_forward.1} parent=1 // pred_check_branch
      %98 = sbr.rel (0) target = $region53
    $region52: #{base_lstm_forward.1} parent=1 // pred_region
      %100 = dma.done [#allocation6], 2048
    $region53: #{base_lstm_forward.1} parent=1 // pred_fallthru
      _
    // Predicated region
    $region54: #{base_lstm_forward.1} parent=1 // pred_check
      _
    $region55: #{base_lstm_forward.1} parent=1 // pred_check_branch
      %102 = sbr.rel (0) target = $region57
    $region56: #{base_lstm_forward.1} parent=1 // pred_region
      %104 = dma.done [#allocation9], 2048
    $region57: #{base_lstm_forward.1} parent=1 // pred_fallthru
      _
    // Predicated region
    $region58: #{base_lstm_forward.1} parent=1 // pred_check
      _
    $region59: #{base_lstm_forward.1} parent=1 // pred_check_branch
      %106 = sbr.rel (0) target = $region61
    $region60: #{base_lstm_forward.1} parent=1 // pred_region
      %108 = dma.done [#allocation9], 16
    $region61: #{base_lstm_forward.1} parent=1 // pred_fallthru
      _
    %v109 = vld [vmem:[%s0] sm:$0xff]
    %v110 = vld [vmem:[%s0 + $0x8] sm:$0xff]
    %v111 = vld [vmem:[%s0 + $0x10] sm:$0xff]
    %v112 = vld [vmem:[%s0 + $0x18] sm:$0xff]
    %v113 = vld [vmem:[%s0 + $0x20] sm:$0xff]
    %v114 = vld [vmem:[%s0 + $0x28] sm:$0xff]
    %v115 = vld [vmem:[%s2] sm:$0xff]
    %v116 = vld [vmem:[%s2 + $0x8] sm:$0xff]
    %v117 = vld [vmem:[%s2 + $0x10] sm:$0xff]
    %v118 = vld [vmem:[%s2 + $0x18] sm:$0xff]
    %v119 = vld [vmem:[%s2 + $0x20] sm:$0xff]
    %v120 = vld [vmem:[%s2 + $0x28] sm:$0xff]
    %v121 = vld [vmem:[%s2 + $0x30] sm:$0xff]
    %v122 = vld [vmem:[%s2 + $0x38] sm:$0xff]
    %v123 = vld [vmem:[#allocation5] sm:$0xf]
    %v125 = vperm.slane %v123, 0
    %v126 = vperm.slane %v123, 1
    %v127 = vperm.slane %v123, 2
    %v128 = vperm.slane %v123, 3
    %vm133 = vcmask 130048
    %v135 = vsel %vm133, %v109, 0
    %v138 = vsel %vm133, %v110, 0
    %v141 = vsel %vm133, %v111, 0
    %v144 = vsel %vm133, %v112, 0
    %v147 = vsel %vm133, %v113, 0
    %v150 = vsel %vm133, %v114, 0
    %152 = vmatpush.msra.mxu0 0.0
    %153 = vmatpush.msra.mxu0 0.0
    %154 = vmatpush.msra.mxu0 0.0
    %155 = vmatpush.msra.mxu0 0.0
    %156 = vmatpush.msra.mxu0 0.0
    %157 = vmatpush.msra.mxu0 0.0
    %158 = vmatpush.msra.mxu0 0.0
    %159 = vmatpush.msra.mxu0 0.0
    %160 = vmatpush.msra.mxu0 0.0
    %161 = vmatpush.msra.mxu0 0.0
    %162 = vmatpush.msra.mxu0 0.0
    %163 = vmatpush.msra.mxu0 0.0
    %164 = vmatpush.msra.mxu0 0.0
    %165 = vmatpush.msra.mxu0 0.0
    %166 = vmatpush.msra.mxu0 %v119
    %167 = vmatpush.msra.mxu0 %v115
    %168 = vmatmul.f32.gmra.mxu0 %v135
    %v169 = vpop.f32.mrf.mxu0
    %v170 = vadd.f32 %v125, %v169
    %171 = vmatmul.f32.gmra.mxu0 %v138
    %v172 = vpop.f32.mrf.mxu0
    %v173 = vadd.f32 %v125, %v172
    %174 = vmatmul.f32.gmra.mxu0 %v141
    %v175 = vpop.f32.mrf.mxu0
    %v176 = vadd.f32 %v125, %v175
    %177 = vmatmul.f32.gmra.mxu0 %v144
    %v178 = vpop.f32.mrf.mxu0
    %v179 = vadd.f32 %v125, %v178
    %180 = vmatmul.f32.gmra.mxu0 %v147
    %v181 = vpop.f32.mrf.mxu0
    %v182 = vadd.f32 %v125, %v181
    %183 = vmatmul.f32.gmra.mxu0 %v150
    %v184 = vpop.f32.mrf.mxu0
    %v185 = vadd.f32 %v125, %v184
    %186 = vdwg.mxu0
    %187 = vmatpush.msra.mxu0 0.0
    %188 = vmatpush.msra.mxu0 0.0
    %189 = vmatpush.msra.mxu0 0.0
    %190 = vmatpush.msra.mxu0 0.0
    %191 = vmatpush.msra.mxu0 0.0
    %192 = vmatpush.msra.mxu0 0.0
    %193 = vmatpush.msra.mxu0 0.0
    %194 = vmatpush.msra.mxu0 0.0
    %195 = vmatpush.msra.mxu0 0.0
    %196 = vmatpush.msra.mxu0 0.0
    %197 = vmatpush.msra.mxu0 0.0
    %198 = vmatpush.msra.mxu0 0.0
    %199 = vmatpush.msra.mxu0 0.0
    %200 = vmatpush.msra.mxu0 0.0
    %201 = vmatpush.msra.mxu0 %v120
    %202 = vmatpush.msra.mxu0 %v116
    %203 = vmatmul.f32.gmra.mxu0 %v135
    %v204 = vpop.f32.mrf.mxu0
    %v205 = vadd.f32 %v126, %v204
    %206 = vmatmul.f32.gmra.mxu0 %v138
    %v207 = vpop.f32.mrf.mxu0
    %v208 = vadd.f32 %v126, %v207
    %209 = vmatmul.f32.gmra.mxu0 %v141
    %v210 = vpop.f32.mrf.mxu0
    %v211 = vadd.f32 %v126, %v210
    %212 = vmatmul.f32.gmra.mxu0 %v144
    %v213 = vpop.f32.mrf.mxu0
    %v214 = vadd.f32 %v126, %v213
    %215 = vmatmul.f32.gmra.mxu0 %v147
    %v216 = vpop.f32.mrf.mxu0
    %v217 = vadd.f32 %v126, %v216
    %218 = vmatmul.f32.gmra.mxu0 %v150
    %v219 = vpop.f32.mrf.mxu0
    %v220 = vadd.f32 %v126, %v219
    %221 = vdwg.mxu0
    %222 = vmatpush.msra.mxu0 0.0
    %223 = vmatpush.msra.mxu0 0.0
    %224 = vmatpush.msra.mxu0 0.0
    %225 = vmatpush.msra.mxu0 0.0
    %226 = vmatpush.msra.mxu0 0.0
    %227 = vmatpush.msra.mxu0 0.0
    %228 = vmatpush.msra.mxu0 0.0
    %229 = vmatpush.msra.mxu0 0.0
    %230 = vmatpush.msra.mxu0 0.0
    %231 = vmatpush.msra.mxu0 0.0
    %232 = vmatpush.msra.mxu0 0.0
    %233 = vmatpush.msra.mxu0 0.0
    %234 = vmatpush.msra.mxu0 0.0
    %235 = vmatpush.msra.mxu0 0.0
    %236 = vmatpush.msra.mxu0 %v121
    %237 = vmatpush.msra.mxu0 %v117
    %238 = vmatmul.f32.gmra.mxu0 %v135
    %v239 = vpop.f32.mrf.mxu0
    %v240 = vadd.f32 %v127, %v239
    %241 = vmatmul.f32.gmra.mxu0 %v138
    %v242 = vpop.f32.mrf.mxu0
    %v243 = vadd.f32 %v127, %v242
    %244 = vmatmul.f32.gmra.mxu0 %v141
    %v245 = vpop.f32.mrf.mxu0
    %v246 = vadd.f32 %v127, %v245
    %247 = vmatmul.f32.gmra.mxu0 %v144
    %v248 = vpop.f32.mrf.mxu0
    %v249 = vadd.f32 %v127, %v248
    %250 = vmatmul.f32.gmra.mxu0 %v147
    %v251 = vpop.f32.mrf.mxu0
    %v252 = vadd.f32 %v127, %v251
    %253 = vmatmul.f32.gmra.mxu0 %v150
    %v254 = vpop.f32.mrf.mxu0
    %v255 = vadd.f32 %v127, %v254
    %256 = vdwg.mxu0
    %257 = vmatpush.msra.mxu0 0.0
    %258 = vmatpush.msra.mxu0 0.0
    %259 = vmatpush.msra.mxu0 0.0
    %260 = vmatpush.msra.mxu0 0.0
    %261 = vmatpush.msra.mxu0 0.0
    %262 = vmatpush.msra.mxu0 0.0
    %263 = vmatpush.msra.mxu0 0.0
    %264 = vmatpush.msra.mxu0 0.0
    %265 = vmatpush.msra.mxu0 0.0
    %266 = vmatpush.msra.mxu0 0.0
    %267 = vmatpush.msra.mxu0 0.0
    %268 = vmatpush.msra.mxu0 0.0
    %269 = vmatpush.msra.mxu0 0.0
    %270 = vmatpush.msra.mxu0 0.0
    %271 = vmatpush.msra.mxu0 %v122
    %272 = vmatpush.msra.mxu0 %v118
    %273 = vmatmul.f32.gmra.mxu0 %v135
    %v274 = vpop.f32.mrf.mxu0
    %v275 = vadd.f32 %v128, %v274
    %276 = vmatmul.f32.gmra.mxu0 %v138
    %v277 = vpop.f32.mrf.mxu0
    %v278 = vadd.f32 %v128, %v277
    %279 = vmatmul.f32.gmra.mxu0 %v141
    %v280 = vpop.f32.mrf.mxu0
    %v281 = vadd.f32 %v128, %v280
    %282 = vmatmul.f32.gmra.mxu0 %v144
    %v283 = vpop.f32.mrf.mxu0
    %v284 = vadd.f32 %v128, %v283
    %285 = vmatmul.f32.gmra.mxu0 %v147
    %v286 = vpop.f32.mrf.mxu0
    %v287 = vadd.f32 %v128, %v286
    %288 = vmatmul.f32.gmra.mxu0 %v150
    %v289 = vpop.f32.mrf.mxu0
    %v290 = vadd.f32 %v128, %v289
    %291 = vdwg.mxu0
    %292 = vst [vmem:[#allocation2] sm:$0xff] %v170
    %293 = vst [vmem:[#allocation2 + $0x8] sm:$0xff] %v205
    %294 = vst [vmem:[#allocation2 + $0x10] sm:$0xff] %v240
    %295 = vst [vmem:[#allocation2 + $0x18] sm:$0xff] %v275
    %296 = vst [vmem:[#allocation2 + $0x20] sm:$0xff] %v173
    %297 = vst [vmem:[#allocation2 + $0x28] sm:$0xff] %v208
    %298 = vst [vmem:[#allocation2 + $0x30] sm:$0xff] %v243
    %299 = vst [vmem:[#allocation2 + $0x38] sm:$0xff] %v278
    %300 = vst [vmem:[#allocation2 + $0x40] sm:$0xff] %v176
    %301 = vst [vmem:[#allocation2 + $0x48] sm:$0xff] %v211
    %302 = vst [vmem:[#allocation2 + $0x50] sm:$0xff] %v246
    %303 = vst [vmem:[#allocation2 + $0x58] sm:$0xff] %v281
    %304 = vst [vmem:[#allocation2 + $0x60] sm:$0xff] %v179
    %305 = vst [vmem:[#allocation2 + $0x68] sm:$0xff] %v214
    %306 = vst [vmem:[#allocation2 + $0x70] sm:$0xff] %v249
    %307 = vst [vmem:[#allocation2 + $0x78] sm:$0xff] %v284
    %308 = vst [vmem:[#allocation2 + $0x80] sm:$0xff] %v182
    %309 = vst [vmem:[#allocation2 + $0x88] sm:$0xff] %v217
    %310 = vst [vmem:[#allocation2 + $0x90] sm:$0xff] %v252
    %311 = vst [vmem:[#allocation2 + $0x98] sm:$0xff] %v287
    %312 = vst [vmem:[#allocation2 + $0xa0] sm:$0xff] %v185
    %313 = vst [vmem:[#allocation2 + $0xa8] sm:$0xff] %v220
    %314 = vst [vmem:[#allocation2 + $0xb0] sm:$0xff] %v255
    %315 = vst [vmem:[#allocation2 + $0xb8] sm:$0xff] %v290
    %v316 = vld [vmem:[%s1] sm:$0xff]
    %v317 = vld [vmem:[%s5] sm:$0xff]
    %v318 = vld [vmem:[%s5 + $0x8] sm:$0xff]
    %v319 = vld [vmem:[%s6] sm:$0x1]
    %v321 = vperm.slane %v319, 0
    %v324 = vsel %vm133, %v316, 0
    %326 = vmatpush.msra.mxu0 0.0
    %327 = vmatpush.msra.mxu0 0.0
    %328 = vmatpush.msra.mxu0 0.0
    %329 = vmatpush.msra.mxu0 0.0
    %330 = vmatpush.msra.mxu0 0.0
    %331 = vmatpush.msra.mxu0 0.0
    %332 = vmatpush.msra.mxu0 0.0
    %333 = vmatpush.msra.mxu0 0.0
    %334 = vmatpush.msra.mxu0 0.0
    %335 = vmatpush.msra.mxu0 0.0
    %336 = vmatpush.msra.mxu0 0.0
    %337 = vmatpush.msra.mxu0 0.0
    %338 = vmatpush.msra.mxu0 0.0
    %339 = vmatpush.msra.mxu0 0.0
    %340 = vmatpush.msra.mxu0 %v318
    %341 = vmatpush.msra.mxu0 %v317
    %342 = vmatmul.f32.gmra.mxu0 %v324
    %v343 = vpop.f32.mrf.mxu0
    %v344 = vadd.f32 %v321, %v343
    %345 = vdwg.mxu0
    %v346 = vld [vmem:[#allocation8] sm:$0xff]
    %v347 = vld [vmem:[#allocation8 + $0x8] sm:$0xff]
    %v348 = vld [vmem:[#allocation8 + $0x10] sm:$0xff]
    %v349 = vld [vmem:[#allocation8 + $0x18] sm:$0xff]
    %v350 = vld [vmem:[#allocation8 + $0x20] sm:$0xff]
    %v351 = vld [vmem:[#allocation8 + $0x28] sm:$0xff]
    %v352 = vld [vmem:[#allocation8 + $0x30] sm:$0xff]
    %v353 = vld [vmem:[#allocation8 + $0x38] sm:$0xff]
    %v354 = vld [vmem:[#allocation8 + $0x40] sm:$0xff]
    %v355 = vld [vmem:[#allocation8 + $0x48] sm:$0xff]
    %v356 = vld [vmem:[#allocation8 + $0x50] sm:$0xff]
    %v357 = vld [vmem:[#allocation8 + $0x58] sm:$0xff]
    %v358 = vld [vmem:[#allocation8 + $0x60] sm:$0xff]
    %v359 = vld [vmem:[#allocation8 + $0x68] sm:$0xff]
    %v360 = vld [vmem:[#allocation8 + $0x70] sm:$0xff]
    %v361 = vld [vmem:[#allocation8 + $0x78] sm:$0xff]
    %v362 = vld [vmem:[#allocation10] sm:$0x1]
    %v364 = vperm.slane %v362, 0
    %366 = vmatpush.msra.mxu0 %v361
    %367 = vmatpush.msra.mxu0 %v360
    %368 = vmatpush.msra.mxu0 %v359
    %369 = vmatpush.msra.mxu0 %v358
    %370 = vmatpush.msra.mxu0 %v357
    %371 = vmatpush.msra.mxu0 %v356
    %372 = vmatpush.msra.mxu0 %v355
    %373 = vmatpush.msra.mxu0 %v354
    %374 = vmatpush.msra.mxu0 %v353
    %375 = vmatpush.msra.mxu0 %v352
    %376 = vmatpush.msra.mxu0 %v351
    %377 = vmatpush.msra.mxu0 %v350
    %378 = vmatpush.msra.mxu0 %v349
    %379 = vmatpush.msra.mxu0 %v348
    %380 = vmatpush.msra.mxu0 %v347
    %381 = vmatpush.msra.mxu0 %v346
    %382 = vmatmul.f32.gmra.mxu0 %v344
    %v383 = vpop.f32.mrf.mxu0
    %v384 = vadd.f32 %v364, %v383
    %385 = vdwg.mxu0
    %v386 = vld [vmem:[#allocation2] sm:$0xff]
    %v387 = vld [vmem:[#allocation2 + $0x8] sm:$0xff]
    %v388 = vld [vmem:[#allocation2 + $0x10] sm:$0xff]
    %v389 = vld [vmem:[#allocation2 + $0x18] sm:$0xff]
    %v390 = vld [vmem:[#allocation3] sm:$0xff]
    %v391 = vld [vmem:[#allocation3 + $0x8] sm:$0xff]
    %v392 = vld [vmem:[#allocation3 + $0x10] sm:$0xff]
    %v393 = vld [vmem:[#allocation3 + $0x18] sm:$0xff]
    %v394 = vld [vmem:[#allocation3 + $0x20] sm:$0xff]
    %v395 = vld [vmem:[#allocation3 + $0x28] sm:$0xff]
    %v396 = vld [vmem:[#allocation3 + $0x30] sm:$0xff]
    %v397 = vld [vmem:[#allocation3 + $0x38] sm:$0xff]
    %v398 = vld [vmem:[#allocation3 + $0x40] sm:$0xff]
    %v399 = vld [vmem:[#allocation3 + $0x48] sm:$0xff]
    %v400 = vld [vmem:[#allocation3 + $0x50] sm:$0xff]
    %v401 = vld [vmem:[#allocation3 + $0x58] sm:$0xff]
    %v402 = vld [vmem:[#allocation3 + $0x60] sm:$0xff]
    %v403 = vld [vmem:[#allocation3 + $0x68] sm:$0xff]
    %v404 = vld [vmem:[#allocation3 + $0x70] sm:$0xff]
    %v405 = vld [vmem:[#allocation3 + $0x78] sm:$0xff]
    %v406 = vld [vmem:[#allocation3 + $0x80] sm:$0xff]
    %v407 = vld [vmem:[#allocation3 + $0x88] sm:$0xff]
    %v408 = vld [vmem:[#allocation3 + $0x90] sm:$0xff]
    %v409 = vld [vmem:[#allocation3 + $0x98] sm:$0xff]
    %v410 = vld [vmem:[#allocation3 + $0xa0] sm:$0xff]
    %v411 = vld [vmem:[#allocation3 + $0xa8] sm:$0xff]
    %v412 = vld [vmem:[#allocation3 + $0xb0] sm:$0xff]
    %v413 = vld [vmem:[#allocation3 + $0xb8] sm:$0xff]
    %v414 = vld [vmem:[#allocation3 + $0xc0] sm:$0xff]
    %v415 = vld [vmem:[#allocation3 + $0xc8] sm:$0xff]
    %v416 = vld [vmem:[#allocation3 + $0xd0] sm:$0xff]
    %v417 = vld [vmem:[#allocation3 + $0xd8] sm:$0xff]
    %v418 = vld [vmem:[#allocation3 + $0xe0] sm:$0xff]
    %v419 = vld [vmem:[#allocation3 + $0xe8] sm:$0xff]
    %v420 = vld [vmem:[#allocation3 + $0xf0] sm:$0xff]
    %v421 = vld [vmem:[#allocation3 + $0xf8] sm:$0xff]
    %v422 = vld [vmem:[#allocation3 + $0x100] sm:$0xff]
    %v423 = vld [vmem:[#allocation3 + $0x108] sm:$0xff]
    %v424 = vld [vmem:[#allocation3 + $0x110] sm:$0xff]
    %v425 = vld [vmem:[#allocation3 + $0x118] sm:$0xff]
    %v426 = vld [vmem:[#allocation3 + $0x120] sm:$0xff]
    %v427 = vld [vmem:[#allocation3 + $0x128] sm:$0xff]
    %v428 = vld [vmem:[#allocation3 + $0x130] sm:$0xff]
    %v429 = vld [vmem:[#allocation3 + $0x138] sm:$0xff]
    %v430 = vld [vmem:[#allocation3 + $0x140] sm:$0xff]
    %v431 = vld [vmem:[#allocation3 + $0x148] sm:$0xff]
    %v432 = vld [vmem:[#allocation3 + $0x150] sm:$0xff]
    %v433 = vld [vmem:[#allocation3 + $0x158] sm:$0xff]
    %v434 = vld [vmem:[#allocation3 + $0x160] sm:$0xff]
    %v435 = vld [vmem:[#allocation3 + $0x168] sm:$0xff]
    %v436 = vld [vmem:[#allocation3 + $0x170] sm:$0xff]
    %v437 = vld [vmem:[#allocation3 + $0x178] sm:$0xff]
    %v438 = vld [vmem:[#allocation3 + $0x180] sm:$0xff]
    %v439 = vld [vmem:[#allocation3 + $0x188] sm:$0xff]
    %v440 = vld [vmem:[#allocation3 + $0x190] sm:$0xff]
    %v441 = vld [vmem:[#allocation3 + $0x198] sm:$0xff]
    %v442 = vld [vmem:[#allocation3 + $0x1a0] sm:$0xff]
    %v443 = vld [vmem:[#allocation3 + $0x1a8] sm:$0xff]
    %v444 = vld [vmem:[#allocation3 + $0x1b0] sm:$0xff]
    %v445 = vld [vmem:[#allocation3 + $0x1b8] sm:$0xff]
    %v446 = vld [vmem:[#allocation3 + $0x1c0] sm:$0xff]
    %v447 = vld [vmem:[#allocation3 + $0x1c8] sm:$0xff]
    %v448 = vld [vmem:[#allocation3 + $0x1d0] sm:$0xff]
    %v449 = vld [vmem:[#allocation3 + $0x1d8] sm:$0xff]
    %v450 = vld [vmem:[#allocation3 + $0x1e0] sm:$0xff]
    %v451 = vld [vmem:[#allocation3 + $0x1e8] sm:$0xff]
    %v452 = vld [vmem:[#allocation3 + $0x1f0] sm:$0xff]
    %v453 = vld [vmem:[#allocation3 + $0x1f8] sm:$0xff]
    %454 = vmatpush.msra.mxu0 %v450
    %455 = vmatpush.msra.mxu0 %v446
    %456 = vmatpush.msra.mxu0 %v442
    %457 = vmatpush.msra.mxu0 %v438
    %458 = vmatpush.msra.mxu0 %v434
    %459 = vmatpush.msra.mxu0 %v430
    %460 = vmatpush.msra.mxu0 %v426
    %461 = vmatpush.msra.mxu0 %v422
    %462 = vmatpush.msra.mxu0 %v418
    %463 = vmatpush.msra.mxu0 %v414
    %464 = vmatpush.msra.mxu0 %v410
    %465 = vmatpush.msra.mxu0 %v406
    %466 = vmatpush.msra.mxu0 %v402
    %467 = vmatpush.msra.mxu0 %v398
    %468 = vmatpush.msra.mxu0 %v394
    %469 = vmatpush.msra.mxu0 %v390
    %470 = vmatmul.f32.gmra.mxu0 0.0
    %v471 = vpop.f32.mrf.mxu0
    %v472 = vadd.f32 0.0, %v471
    %473 = vdwg.mxu0
    %474 = vmatpush.msra.mxu0 %v451
    %475 = vmatpush.msra.mxu0 %v447
    %476 = vmatpush.msra.mxu0 %v443
    %477 = vmatpush.msra.mxu0 %v439
    %478 = vmatpush.msra.mxu0 %v435
    %479 = vmatpush.msra.mxu0 %v431
    %480 = vmatpush.msra.mxu0 %v427
    %481 = vmatpush.msra.mxu0 %v423
    %482 = vmatpush.msra.mxu0 %v419
    %483 = vmatpush.msra.mxu0 %v415
    %484 = vmatpush.msra.mxu0 %v411
    %485 = vmatpush.msra.mxu0 %v407
    %486 = vmatpush.msra.mxu0 %v403
    %487 = vmatpush.msra.mxu0 %v399
    %488 = vmatpush.msra.mxu0 %v395
    %489 = vmatpush.msra.mxu0 %v391
    %490 = vmatmul.f32.gmra.mxu0 0.0
    %v491 = vpop.f32.mrf.mxu0
    %v492 = vadd.f32 0.0, %v491
    %493 = vdwg.mxu0
    %494 = vmatpush.msra.mxu0 %v452
    %495 = vmatpush.msra.mxu0 %v448
    %496 = vmatpush.msra.mxu0 %v444
    %497 = vmatpush.msra.mxu0 %v440
    %498 = vmatpush.msra.mxu0 %v436
    %499 = vmatpush.msra.mxu0 %v432
    %500 = vmatpush.msra.mxu0 %v428
    %501 = vmatpush.msra.mxu0 %v424
    %502 = vmatpush.msra.mxu0 %v420
    %503 = vmatpush.msra.mxu0 %v416
    %504 = vmatpush.msra.mxu0 %v412
    %505 = vmatpush.msra.mxu0 %v408
    %506 = vmatpush.msra.mxu0 %v404
    %507 = vmatpush.msra.mxu0 %v400
    %508 = vmatpush.msra.mxu0 %v396
    %509 = vmatpush.msra.mxu0 %v392
    %510 = vmatmul.f32.gmra.mxu0 0.0
    %v511 = vpop.f32.mrf.mxu0
    %v512 = vadd.f32 0.0, %v511
    %513 = vdwg.mxu0
    %514 = vmatpush.msra.mxu0 %v453
    %515 = vmatpush.msra.mxu0 %v449
    %516 = vmatpush.msra.mxu0 %v445
    %517 = vmatpush.msra.mxu0 %v441
    %518 = vmatpush.msra.mxu0 %v437
    %519 = vmatpush.msra.mxu0 %v433
    %520 = vmatpush.msra.mxu0 %v429
    %521 = vmatpush.msra.mxu0 %v425
    %522 = vmatpush.msra.mxu0 %v421
    %523 = vmatpush.msra.mxu0 %v417
    %524 = vmatpush.msra.mxu0 %v413
    %525 = vmatpush.msra.mxu0 %v409
    %526 = vmatpush.msra.mxu0 %v405
    %527 = vmatpush.msra.mxu0 %v401
    %528 = vmatpush.msra.mxu0 %v397
    %529 = vmatpush.msra.mxu0 %v393
    %530 = vmatmul.f32.gmra.mxu0 0.0
    %v531 = vpop.f32.mrf.mxu0
    %v532 = vadd.f32 0.0, %v531
    %533 = vdwg.mxu0
    %v534 = vadd.f32 %v386, %v472
    %v535 = vadd.f32 %v387, %v492
    %v536 = vadd.f32 %v388, %v512
    %v537 = vadd.f32 %v389, %v532
    %v538 = vmul.f32 %v534, 0.5
    %v539 = vtanh.pop %v538
    %v540 = vadd.f32 %v539, 1.0
    %v541 = vmul.f32 %v540, 0.5
    %v542 = vmul.f32 %v535, 0.5
    %v543 = vtanh.pop %v542
    %v544 = vadd.f32 %v543, 1.0
    %v545 = vmul.f32 %v544, 0.5
    %v546 = vtanh.pop %v536
    %v547 = vmul.f32 %v537, 0.5
    %v548 = vtanh.pop %v547
    %v549 = vadd.f32 %v548, 1.0
    %v550 = vmul.f32 %v549, 0.5
    %v551 = vmul.f32 %v545, 0.0
    %v552 = vmul.f32 %v541, %v546
    %v553 = vadd.f32 %v551, %v552
    %v554 = vtanh.pop %v553
    %v555 = vmul.f32 %v550, %v554
    %v556 = vld [vmem:[#allocation7] sm:$0xff]
    %v557 = vld [vmem:[#allocation7 + $0x8] sm:$0xff]
    %v558 = vld [vmem:[#allocation7 + $0x10] sm:$0xff]
    %v559 = vld [vmem:[#allocation7 + $0x18] sm:$0xff]
    %v560 = vld [vmem:[#allocation7 + $0x20] sm:$0xff]
    %v561 = vld [vmem:[#allocation7 + $0x28] sm:$0xff]
    %v562 = vld [vmem:[#allocation7 + $0x30] sm:$0xff]
    %v563 = vld [vmem:[#allocation7 + $0x38] sm:$0xff]
    %v564 = vld [vmem:[#allocation7 + $0x40] sm:$0xff]
    %v565 = vld [vmem:[#allocation7 + $0x48] sm:$0xff]
    %v566 = vld [vmem:[#allocation7 + $0x50] sm:$0xff]
    %v567 = vld [vmem:[#allocation7 + $0x58] sm:$0xff]
    %v568 = vld [vmem:[#allocation7 + $0x60] sm:$0xff]
    %v569 = vld [vmem:[#allocation7 + $0x68] sm:$0xff]
    %v570 = vld [vmem:[#allocation7 + $0x70] sm:$0xff]
    %v571 = vld [vmem:[#allocation7 + $0x78] sm:$0xff]
    %572 = vmatpush.msra.mxu0 %v571
    %573 = vmatpush.msra.mxu0 %v570
    %574 = vmatpush.msra.mxu0 %v569
    %575 = vmatpush.msra.mxu0 %v568
    %576 = vmatpush.msra.mxu0 %v567
    %577 = vmatpush.msra.mxu0 %v566
    %578 = vmatpush.msra.mxu0 %v565
    %579 = vmatpush.msra.mxu0 %v564
    %580 = vmatpush.msra.mxu0 %v563
    %581 = vmatpush.msra.mxu0 %v562
    %582 = vmatpush.msra.mxu0 %v561
    %583 = vmatpush.msra.mxu0 %v560
    %584 = vmatpush.msra.mxu0 %v559
    %585 = vmatpush.msra.mxu0 %v558
    %586 = vmatpush.msra.mxu0 %v557
    %587 = vmatpush.msra.mxu0 %v556
    %588 = vmatmul.f32.gmra.mxu0 %v555
    %v589 = vpop.f32.mrf.mxu0
    %v590 = vadd.f32 %v384, %v589
    %591 = vdwg.mxu0
    %v592 = vmax.f32 %v590, 0.0
    %593 = vst [vmem:[%s10] sm:$0xff] %v592
    %v594 = vld [vmem:[#allocation2 + $0x20] sm:$0xff]
    %v595 = vld [vmem:[#allocation2 + $0x28] sm:$0xff]
    %v596 = vld [vmem:[#allocation2 + $0x30] sm:$0xff]
    %v597 = vld [vmem:[#allocation2 + $0x38] sm:$0xff]
    %v598 = vld [vmem:[#allocation3] sm:$0xff]
    %v599 = vld [vmem:[#allocation3 + $0x8] sm:$0xff]
    %v600 = vld [vmem:[#allocation3 + $0x10] sm:$0xff]
    %v601 = vld [vmem:[#allocation3 + $0x18] sm:$0xff]
    %v602 = vld [vmem:[#allocation3 + $0x20] sm:$0xff]
    %v603 = vld [vmem:[#allocation3 + $0x28] sm:$0xff]
    %v604 = vld [vmem:[#allocation3 + $0x30] sm:$0xff]
    %v605 = vld [vmem:[#allocation3 + $0x38] sm:$0xff]
    %v606 = vld [vmem:[#allocation3 + $0x40] sm:$0xff]
    %v607 = vld [vmem:[#allocation3 + $0x48] sm:$0xff]
    %v608 = vld [vmem:[#allocation3 + $0x50] sm:$0xff]
    %v609 = vld [vmem:[#allocation3 + $0x58] sm:$0xff]
    %v610 = vld [vmem:[#allocation3 + $0x60] sm:$0xff]
    %v611 = vld [vmem:[#allocation3 + $0x68] sm:$0xff]
    %v612 = vld [vmem:[#allocation3 + $0x70] sm:$0xff]
    %v613 = vld [vmem:[#allocation3 + $0x78] sm:$0xff]
    %v614 = vld [vmem:[#allocation3 + $0x80] sm:$0xff]
    %v615 = vld [vmem:[#allocation3 + $0x88] sm:$0xff]
    %v616 = vld [vmem:[#allocation3 + $0x90] sm:$0xff]
    %v617 = vld [vmem:[#allocation3 + $0x98] sm:$0xff]
    %v618 = vld [vmem:[#allocation3 + $0xa0] sm:$0xff]
    %v619 = vld [vmem:[#allocation3 + $0xa8] sm:$0xff]
    %v620 = vld [vmem:[#allocation3 + $0xb0] sm:$0xff]
    %v621 = vld [vmem:[#allocation3 + $0xb8] sm:$0xff]
    %v622 = vld [vmem:[#allocation3 + $0xc0] sm:$0xff]
    %v623 = vld [vmem:[#allocation3 + $0xc8] sm:$0xff]
    %v624 = vld [vmem:[#allocation3 + $0xd0] sm:$0xff]
    %v625 = vld [vmem:[#allocation3 + $0xd8] sm:$0xff]
    %v626 = vld [vmem:[#allocation3 + $0xe0] sm:$0xff]
    %v627 = vld [vmem:[#allocation3 + $0xe8] sm:$0xff]
    %v628 = vld [vmem:[#allocation3 + $0xf0] sm:$0xff]
    %v629 = vld [vmem:[#allocation3 + $0xf8] sm:$0xff]
    %v630 = vld [vmem:[#allocation3 + $0x100] sm:$0xff]
    %v631 = vld [vmem:[#allocation3 + $0x108] sm:$0xff]
    %v632 = vld [vmem:[#allocation3 + $0x110] sm:$0xff]
    %v633 = vld [vmem:[#allocation3 + $0x118] sm:$0xff]
    %v634 = vld [vmem:[#allocation3 + $0x120] sm:$0xff]
    %v635 = vld [vmem:[#allocation3 + $0x128] sm:$0xff]
    %v636 = vld [vmem:[#allocation3 + $0x130] sm:$0xff]
    %v637 = vld [vmem:[#allocation3 + $0x138] sm:$0xff]
    %v638 = vld [vmem:[#allocation3 + $0x140] sm:$0xff]
    %v639 = vld [vmem:[#allocation3 + $0x148] sm:$0xff]
    %v640 = vld [vmem:[#allocation3 + $0x150] sm:$0xff]
    %v641 = vld [vmem:[#allocation3 + $0x158] sm:$0xff]
    %v642 = vld [vmem:[#allocation3 + $0x160] sm:$0xff]
    %v643 = vld [vmem:[#allocation3 + $0x168] sm:$0xff]
    %v644 = vld [vmem:[#allocation3 + $0x170] sm:$0xff]
    %v645 = vld [vmem:[#allocation3 + $0x178] sm:$0xff]
    %v646 = vld [vmem:[#allocation3 + $0x180] sm:$0xff]
    %v647 = vld [vmem:[#allocation3 + $0x188] sm:$0xff]
    %v648 = vld [vmem:[#allocation3 + $0x190] sm:$0xff]
    %v649 = vld [vmem:[#allocation3 + $0x198] sm:$0xff]
    %v650 = vld [vmem:[#allocation3 + $0x1a0] sm:$0xff]
    %v651 = vld [vmem:[#allocation3 + $0x1a8] sm:$0xff]
    %v652 = vld [vmem:[#allocation3 + $0x1b0] sm:$0xff]
    %v653 = vld [vmem:[#allocation3 + $0x1b8] sm:$0xff]
    %v654 = vld [vmem:[#allocation3 + $0x1c0] sm:$0xff]
    %v655 = vld [vmem:[#allocation3 + $0x1c8] sm:$0xff]
    %v656 = vld [vmem:[#allocation3 + $0x1d0] sm:$0xff]
    %v657 = vld [vmem:[#allocation3 + $0x1d8] sm:$0xff]
    %v658 = vld [vmem:[#allocation3 + $0x1e0] sm:$0xff]
    %v659 = vld [vmem:[#allocation3 + $0x1e8] sm:$0xff]
    %v660 = vld [vmem:[#allocation3 + $0x1f0] sm:$0xff]
    %v661 = vld [vmem:[#allocation3 + $0x1f8] sm:$0xff]
    %662 = vmatpush.msra.mxu0 %v658
    %663 = vmatpush.msra.mxu0 %v654
    %664 = vmatpush.msra.mxu0 %v650
    %665 = vmatpush.msra.mxu0 %v646
    %666 = vmatpush.msra.mxu0 %v642
    %667 = vmatpush.msra.mxu0 %v638
    %668 = vmatpush.msra.mxu0 %v634
    %669 = vmatpush.msra.mxu0 %v630
    %670 = vmatpush.msra.mxu0 %v626
    %671 = vmatpush.msra.mxu0 %v622
    %672 = vmatpush.msra.mxu0 %v618
    %673 = vmatpush.msra.mxu0 %v614
    %674 = vmatpush.msra.mxu0 %v610
    %675 = vmatpush.msra.mxu0 %v606
    %676 = vmatpush.msra.mxu0 %v602
    %677 = vmatpush.msra.mxu0 %v598
    %678 = vmatmul.f32.gmra.mxu0 %v555
    %v679 = vpop.f32.mrf.mxu0
    %v680 = vadd.f32 0.0, %v679
    %681 = vdwg.mxu0
    %682 = vmatpush.msra.mxu0 %v659
    %683 = vmatpush.msra.mxu0 %v655
    %684 = vmatpush.msra.mxu0 %v651
    %685 = vmatpush.msra.mxu0 %v647
    %686 = vmatpush.msra.mxu0 %v643
    %687 = vmatpush.msra.mxu0 %v639
    %688 = vmatpush.msra.mxu0 %v635
    %689 = vmatpush.msra.mxu0 %v631
    %690 = vmatpush.msra.mxu0 %v627
    %691 = vmatpush.msra.mxu0 %v623
    %692 = vmatpush.msra.mxu0 %v619
    %693 = vmatpush.msra.mxu0 %v615
    %694 = vmatpush.msra.mxu0 %v611
    %695 = vmatpush.msra.mxu0 %v607
    %696 = vmatpush.msra.mxu0 %v603
    %697 = vmatpush.msra.mxu0 %v599
    %698 = vmatmul.f32.gmra.mxu0 %v555
    %v699 = vpop.f32.mrf.mxu0
    %v700 = vadd.f32 0.0, %v699
    %701 = vdwg.mxu0
    %702 = vmatpush.msra.mxu0 %v660
    %703 = vmatpush.msra.mxu0 %v656
    %704 = vmatpush.msra.mxu0 %v652
    %705 = vmatpush.msra.mxu0 %v648
    %706 = vmatpush.msra.mxu0 %v644
    %707 = vmatpush.msra.mxu0 %v640
    %708 = vmatpush.msra.mxu0 %v636
    %709 = vmatpush.msra.mxu0 %v632
    %710 = vmatpush.msra.mxu0 %v628
    %711 = vmatpush.msra.mxu0 %v624
    %712 = vmatpush.msra.mxu0 %v620
    %713 = vmatpush.msra.mxu0 %v616
    %714 = vmatpush.msra.mxu0 %v612
    %715 = vmatpush.msra.mxu0 %v608
    %716 = vmatpush.msra.mxu0 %v604
    %717 = vmatpush.msra.mxu0 %v600
    %718 = vmatmul.f32.gmra.mxu0 %v555
    %v719 = vpop.f32.mrf.mxu0
    %v720 = vadd.f32 0.0, %v719
    %721 = vdwg.mxu0
    %722 = vmatpush.msra.mxu0 %v661
    %723 = vmatpush.msra.mxu0 %v657
    %724 = vmatpush.msra.mxu0 %v653
    %725 = vmatpush.msra.mxu0 %v649
    %726 = vmatpush.msra.mxu0 %v645
    %727 = vmatpush.msra.mxu0 %v641
    %728 = vmatpush.msra.mxu0 %v637
    %729 = vmatpush.msra.mxu0 %v633
    %730 = vmatpush.msra.mxu0 %v629
    %731 = vmatpush.msra.mxu0 %v625
    %732 = vmatpush.msra.mxu0 %v621
    %733 = vmatpush.msra.mxu0 %v617
    %734 = vmatpush.msra.mxu0 %v613
    %735 = vmatpush.msra.mxu0 %v609
    %736 = vmatpush.msra.mxu0 %v605
    %737 = vmatpush.msra.mxu0 %v601
    %738 = vmatmul.f32.gmra.mxu0 %v555
    %v739 = vpop.f32.mrf.mxu0
    %v740 = vadd.f32 0.0, %v739
    %741 = vdwg.mxu0
    %v742 = vadd.f32 %v594, %v680
    %v743 = vadd.f32 %v595, %v700
    %v744 = vadd.f32 %v596, %v720
    %v745 = vadd.f32 %v597, %v740
    %v746 = vmul.f32 %v742, 0.5
    %v747 = vtanh.pop %v746
    %v748 = vadd.f32 %v747, 1.0
    %v749 = vmul.f32 %v748, 0.5
    %v750 = vmul.f32 %v743, 0.5
    %v751 = vtanh.pop %v750
    %v752 = vadd.f32 %v751, 1.0
    %v753 = vmul.f32 %v752, 0.5
    %v754 = vtanh.pop %v744
    %v755 = vmul.f32 %v745, 0.5
    %v756 = vtanh.pop %v755
    %v757 = vadd.f32 %v756, 1.0
    %v758 = vmul.f32 %v757, 0.5
    %v759 = vmul.f32 %v753, %v553
    %v760 = vmul.f32 %v749, %v754
    %v761 = vadd.f32 %v759, %v760
    %v762 = vtanh.pop %v761
    %v763 = vmul.f32 %v758, %v762
    %v764 = vld [vmem:[#allocation7] sm:$0xff]
    %v765 = vld [vmem:[#allocation7 + $0x8] sm:$0xff]
    %v766 = vld [vmem:[#allocation7 + $0x10] sm:$0xff]
    %v767 = vld [vmem:[#allocation7 + $0x18] sm:$0xff]
    %v768 = vld [vmem:[#allocation7 + $0x20] sm:$0xff]
    %v769 = vld [vmem:[#allocation7 + $0x28] sm:$0xff]
    %v770 = vld [vmem:[#allocation7 + $0x30] sm:$0xff]
    %v771 = vld [vmem:[#allocation7 + $0x38] sm:$0xff]
    %v772 = vld [vmem:[#allocation7 + $0x40] sm:$0xff]
    %v773 = vld [vmem:[#allocation7 + $0x48] sm:$0xff]
    %v774 = vld [vmem:[#allocation7 + $0x50] sm:$0xff]
    %v775 = vld [vmem:[#allocation7 + $0x58] sm:$0xff]
    %v776 = vld [vmem:[#allocation7 + $0x60] sm:$0xff]
    %v777 = vld [vmem:[#allocation7 + $0x68] sm:$0xff]
    %v778 = vld [vmem:[#allocation7 + $0x70] sm:$0xff]
    %v779 = vld [vmem:[#allocation7 + $0x78] sm:$0xff]
    %780 = vmatpush.msra.mxu0 %v779
    %781 = vmatpush.msra.mxu0 %v778
    %782 = vmatpush.msra.mxu0 %v777
    %783 = vmatpush.msra.mxu0 %v776
    %784 = vmatpush.msra.mxu0 %v775
    %785 = vmatpush.msra.mxu0 %v774
    %786 = vmatpush.msra.mxu0 %v773
    %787 = vmatpush.msra.mxu0 %v772
    %788 = vmatpush.msra.mxu0 %v771
    %789 = vmatpush.msra.mxu0 %v770
    %790 = vmatpush.msra.mxu0 %v769
    %791 = vmatpush.msra.mxu0 %v768
    %792 = vmatpush.msra.mxu0 %v767
    %793 = vmatpush.msra.mxu0 %v766
    %794 = vmatpush.msra.mxu0 %v765
    %795 = vmatpush.msra.mxu0 %v764
    %796 = vmatmul.f32.gmra.mxu0 %v763
    %v797 = vpop.f32.mrf.mxu0
    %v798 = vadd.f32 %v384, %v797
    %799 = vdwg.mxu0
    %v800 = vmax.f32 %v798, 0.0
    %801 = vst [vmem:[%s10 + $0x8] sm:$0xff] %v800
    %v802 = vld [vmem:[#allocation2 + $0x40] sm:$0xff]
    %v803 = vld [vmem:[#allocation2 + $0x48] sm:$0xff]
    %v804 = vld [vmem:[#allocation2 + $0x50] sm:$0xff]
    %v805 = vld [vmem:[#allocation2 + $0x58] sm:$0xff]
    %v806 = vld [vmem:[#allocation3] sm:$0xff]
    %v807 = vld [vmem:[#allocation3 + $0x8] sm:$0xff]
    %v808 = vld [vmem:[#allocation3 + $0x10] sm:$0xff]
    %v809 = vld [vmem:[#allocation3 + $0x18] sm:$0xff]
    %v810 = vld [vmem:[#allocation3 + $0x20] sm:$0xff]
    %v811 = vld [vmem:[#allocation3 + $0x28] sm:$0xff]
    %v812 = vld [vmem:[#allocation3 + $0x30] sm:$0xff]
    %v813 = vld [vmem:[#allocation3 + $0x38] sm:$0xff]
    %v814 = vld [vmem:[#allocation3 + $0x40] sm:$0xff]
    %v815 = vld [vmem:[#allocation3 + $0x48] sm:$0xff]
    %v816 = vld [vmem:[#allocation3 + $0x50] sm:$0xff]
    %v817 = vld [vmem:[#allocation3 + $0x58] sm:$0xff]
    %v818 = vld [vmem:[#allocation3 + $0x60] sm:$0xff]
    %v819 = vld [vmem:[#allocation3 + $0x68] sm:$0xff]
    %v820 = vld [vmem:[#allocation3 + $0x70] sm:$0xff]
    %v821 = vld [vmem:[#allocation3 + $0x78] sm:$0xff]
    %v822 = vld [vmem:[#allocation3 + $0x80] sm:$0xff]
    %v823 = vld [vmem:[#allocation3 + $0x88] sm:$0xff]
    %v824 = vld [vmem:[#allocation3 + $0x90] sm:$0xff]
    %v825 = vld [vmem:[#allocation3 + $0x98] sm:$0xff]
    %v826 = vld [vmem:[#allocation3 + $0xa0] sm:$0xff]
    %v827 = vld [vmem:[#allocation3 + $0xa8] sm:$0xff]
    %v828 = vld [vmem:[#allocation3 + $0xb0] sm:$0xff]
    %v829 = vld [vmem:[#allocation3 + $0xb8] sm:$0xff]
    %v830 = vld [vmem:[#allocation3 + $0xc0] sm:$0xff]
    %v831 = vld [vmem:[#allocation3 + $0xc8] sm:$0xff]
    %v832 = vld [vmem:[#allocation3 + $0xd0] sm:$0xff]
    %v833 = vld [vmem:[#allocation3 + $0xd8] sm:$0xff]
    %v834 = vld [vmem:[#allocation3 + $0xe0] sm:$0xff]
    %v835 = vld [vmem:[#allocation3 + $0xe8] sm:$0xff]
    %v836 = vld [vmem:[#allocation3 + $0xf0] sm:$0xff]
    %v837 = vld [vmem:[#allocation3 + $0xf8] sm:$0xff]
    %v838 = vld [vmem:[#allocation3 + $0x100] sm:$0xff]
    %v839 = vld [vmem:[#allocation3 + $0x108] sm:$0xff]
    %v840 = vld [vmem:[#allocation3 + $0x110] sm:$0xff]
    %v841 = vld [vmem:[#allocation3 + $0x118] sm:$0xff]
    %v842 = vld [vmem:[#allocation3 + $0x120] sm:$0xff]
    %v843 = vld [vmem:[#allocation3 + $0x128] sm:$0xff]
    %v844 = vld [vmem:[#allocation3 + $0x130] sm:$0xff]
    %v845 = vld [vmem:[#allocation3 + $0x138] sm:$0xff]
    %v846 = vld [vmem:[#allocation3 + $0x140] sm:$0xff]
    %v847 = vld [vmem:[#allocation3 + $0x148] sm:$0xff]
    %v848 = vld [vmem:[#allocation3 + $0x150] sm:$0xff]
    %v849 = vld [vmem:[#allocation3 + $0x158] sm:$0xff]
    %v850 = vld [vmem:[#allocation3 + $0x160] sm:$0xff]
    %v851 = vld [vmem:[#allocation3 + $0x168] sm:$0xff]
    %v852 = vld [vmem:[#allocation3 + $0x170] sm:$0xff]
    %v853 = vld [vmem:[#allocation3 + $0x178] sm:$0xff]
    %v854 = vld [vmem:[#allocation3 + $0x180] sm:$0xff]
    %v855 = vld [vmem:[#allocation3 + $0x188] sm:$0xff]
    %v856 = vld [vmem:[#allocation3 + $0x190] sm:$0xff]
    %v857 = vld [vmem:[#allocation3 + $0x198] sm:$0xff]
    %v858 = vld [vmem:[#allocation3 + $0x1a0] sm:$0xff]
    %v859 = vld [vmem:[#allocation3 + $0x1a8] sm:$0xff]
    %v860 = vld [vmem:[#allocation3 + $0x1b0] sm:$0xff]
    %v861 = vld [vmem:[#allocation3 + $0x1b8] sm:$0xff]
    %v862 = vld [vmem:[#allocation3 + $0x1c0] sm:$0xff]
    %v863 = vld [vmem:[#allocation3 + $0x1c8] sm:$0xff]
    %v864 = vld [vmem:[#allocation3 + $0x1d0] sm:$0xff]
    %v865 = vld [vmem:[#allocation3 + $0x1d8] sm:$0xff]
    %v866 = vld [vmem:[#allocation3 + $0x1e0] sm:$0xff]
    %v867 = vld [vmem:[#allocation3 + $0x1e8] sm:$0xff]
    %v868 = vld [vmem:[#allocation3 + $0x1f0] sm:$0xff]
    %v869 = vld [vmem:[#allocation3 + $0x1f8] sm:$0xff]
    %870 = vmatpush.msra.mxu0 %v866
    %871 = vmatpush.msra.mxu0 %v862
    %872 = vmatpush.msra.mxu0 %v858
    %873 = vmatpush.msra.mxu0 %v854
    %874 = vmatpush.msra.mxu0 %v850
    %875 = vmatpush.msra.mxu0 %v846
    %876 = vmatpush.msra.mxu0 %v842
    %877 = vmatpush.msra.mxu0 %v838
    %878 = vmatpush.msra.mxu0 %v834
    %879 = vmatpush.msra.mxu0 %v830
    %880 = vmatpush.msra.mxu0 %v826
    %881 = vmatpush.msra.mxu0 %v822
    %882 = vmatpush.msra.mxu0 %v818
    %883 = vmatpush.msra.mxu0 %v814
    %884 = vmatpush.msra.mxu0 %v810
    %885 = vmatpush.msra.mxu0 %v806
    %886 = vmatmul.f32.gmra.mxu0 %v763
    %v887 = vpop.f32.mrf.mxu0
    %v888 = vadd.f32 0.0, %v887
    %889 = vdwg.mxu0
    %890 = vmatpush.msra.mxu0 %v867
    %891 = vmatpush.msra.mxu0 %v863
    %892 = vmatpush.msra.mxu0 %v859
    %893 = vmatpush.msra.mxu0 %v855
    %894 = vmatpush.msra.mxu0 %v851
    %895 = vmatpush.msra.mxu0 %v847
    %896 = vmatpush.msra.mxu0 %v843
    %897 = vmatpush.msra.mxu0 %v839
    %898 = vmatpush.msra.mxu0 %v835
    %899 = vmatpush.msra.mxu0 %v831
    %900 = vmatpush.msra.mxu0 %v827
    %901 = vmatpush.msra.mxu0 %v823
    %902 = vmatpush.msra.mxu0 %v819
    %903 = vmatpush.msra.mxu0 %v815
    %904 = vmatpush.msra.mxu0 %v811
    %905 = vmatpush.msra.mxu0 %v807
    %906 = vmatmul.f32.gmra.mxu0 %v763
    %v907 = vpop.f32.mrf.mxu0
    %v908 = vadd.f32 0.0, %v907
    %909 = vdwg.mxu0
    %910 = vmatpush.msra.mxu0 %v868
    %911 = vmatpush.msra.mxu0 %v864
    %912 = vmatpush.msra.mxu0 %v860
    %913 = vmatpush.msra.mxu0 %v856
    %914 = vmatpush.msra.mxu0 %v852
    %915 = vmatpush.msra.mxu0 %v848
    %916 = vmatpush.msra.mxu0 %v844
    %917 = vmatpush.msra.mxu0 %v840
    %918 = vmatpush.msra.mxu0 %v836
    %919 = vmatpush.msra.mxu0 %v832
    %920 = vmatpush.msra.mxu0 %v828
    %921 = vmatpush.msra.mxu0 %v824
    %922 = vmatpush.msra.mxu0 %v820
    %923 = vmatpush.msra.mxu0 %v816
    %924 = vmatpush.msra.mxu0 %v812
    %925 = vmatpush.msra.mxu0 %v808
    %926 = vmatmul.f32.gmra.mxu0 %v763
    %v927 = vpop.f32.mrf.mxu0
    %v928 = vadd.f32 0.0, %v927
    %929 = vdwg.mxu0
    %930 = vmatpush.msra.mxu0 %v869
    %931 = vmatpush.msra.mxu0 %v865
    %932 = vmatpush.msra.mxu0 %v861
    %933 = vmatpush.msra.mxu0 %v857
    %934 = vmatpush.msra.mxu0 %v853
    %935 = vmatpush.msra.mxu0 %v849
    %936 = vmatpush.msra.mxu0 %v845
    %937 = vmatpush.msra.mxu0 %v841
    %938 = vmatpush.msra.mxu0 %v837
    %939 = vmatpush.msra.mxu0 %v833
    %940 = vmatpush.msra.mxu0 %v829
    %941 = vmatpush.msra.mxu0 %v825
    %942 = vmatpush.msra.mxu0 %v821
    %943 = vmatpush.msra.mxu0 %v817
    %944 = vmatpush.msra.mxu0 %v813
    %945 = vmatpush.msra.mxu0 %v809
    %946 = vmatmul.f32.gmra.mxu0 %v763
    %v947 = vpop.f32.mrf.mxu0
    %v948 = vadd.f32 0.0, %v947
    %949 = vdwg.mxu0
    %v950 = vadd.f32 %v802, %v888
    %v951 = vadd.f32 %v803, %v908
    %v952 = vadd.f32 %v804, %v928
    %v953 = vadd.f32 %v805, %v948
    %v954 = vmul.f32 %v950, 0.5
    %v955 = vtanh.pop %v954
    %v956 = vadd.f32 %v955, 1.0
    %v957 = vmul.f32 %v956, 0.5
    %v958 = vmul.f32 %v951, 0.5
    %v959 = vtanh.pop %v958
    %v960 = vadd.f32 %v959, 1.0
    %v961 = vmul.f32 %v960, 0.5
    %v962 = vtanh.pop %v952
    %v963 = vmul.f32 %v953, 0.5
    %v964 = vtanh.pop %v963
    %v965 = vadd.f32 %v964, 1.0
    %v966 = vmul.f32 %v965, 0.5
    %v967 = vmul.f32 %v961, %v761
    %v968 = vmul.f32 %v957, %v962
    %v969 = vadd.f32 %v967, %v968
    %v970 = vtanh.pop %v969
    %v971 = vmul.f32 %v966, %v970
    %v972 = vld [vmem:[#allocation7] sm:$0xff]
    %v973 = vld [vmem:[#allocation7 + $0x8] sm:$0xff]
    %v974 = vld [vmem:[#allocation7 + $0x10] sm:$0xff]
    %v975 = vld [vmem:[#allocation7 + $0x18] sm:$0xff]
    %v976 = vld [vmem:[#allocation7 + $0x20] sm:$0xff]
    %v977 = vld [vmem:[#allocation7 + $0x28] sm:$0xff]
    %v978 = vld [vmem:[#allocation7 + $0x30] sm:$0xff]
    %v979 = vld [vmem:[#allocation7 + $0x38] sm:$0xff]
    %v980 = vld [vmem:[#allocation7 + $0x40] sm:$0xff]
    %v981 = vld [vmem:[#allocation7 + $0x48] sm:$0xff]
    %v982 = vld [vmem:[#allocation7 + $0x50] sm:$0xff]
    %v983 = vld [vmem:[#allocation7 + $0x58] sm:$0xff]
    %v984 = vld [vmem:[#allocation7 + $0x60] sm:$0xff]
    %v985 = vld [vmem:[#allocation7 + $0x68] sm:$0xff]
    %v986 = vld [vmem:[#allocation7 + $0x70] sm:$0xff]
    %v987 = vld [vmem:[#allocation7 + $0x78] sm:$0xff]
    %988 = vmatpush.msra.mxu0 %v987
    %989 = vmatpush.msra.mxu0 %v986
    %990 = vmatpush.msra.mxu0 %v985
    %991 = vmatpush.msra.mxu0 %v984
    %992 = vmatpush.msra.mxu0 %v983
    %993 = vmatpush.msra.mxu0 %v982
    %994 = vmatpush.msra.mxu0 %v981
    %995 = vmatpush.msra.mxu0 %v980
    %996 = vmatpush.msra.mxu0 %v979
    %997 = vmatpush.msra.mxu0 %v978
    %998 = vmatpush.msra.mxu0 %v977
    %999 = vmatpush.msra.mxu0 %v976
    %1000 = vmatpush.msra.mxu0 %v975
    %1001 = vmatpush.msra.mxu0 %v974
    %1002 = vmatpush.msra.mxu0 %v973
    %1003 = vmatpush.msra.mxu0 %v972
    %1004 = vmatmul.f32.gmra.mxu0 %v971
    %v1005 = vpop.f32.mrf.mxu0
    %v1006 = vadd.f32 %v384, %v1005
    %1007 = vdwg.mxu0
    %v1008 = vmax.f32 %v1006, 0.0
    %1009 = vst [vmem:[%s10 + $0x10] sm:$0xff] %v1008
    %v1010 = vld [vmem:[#allocation2 + $0x60] sm:$0xff]
    %v1011 = vld [vmem:[#allocation2 + $0x68] sm:$0xff]
    %v1012 = vld [vmem:[#allocation2 + $0x70] sm:$0xff]
    %v1013 = vld [vmem:[#allocation2 + $0x78] sm:$0xff]
    %v1014 = vld [vmem:[#allocation3] sm:$0xff]
    %v1015 = vld [vmem:[#allocation3 + $0x8] sm:$0xff]
    %v1016 = vld [vmem:[#allocation3 + $0x10] sm:$0xff]
    %v1017 = vld [vmem:[#allocation3 + $0x18] sm:$0xff]
    %v1018 = vld [vmem:[#allocation3 + $0x20] sm:$0xff]
    %v1019 = vld [vmem:[#allocation3 + $0x28] sm:$0xff]
    %v1020 = vld [vmem:[#allocation3 + $0x30] sm:$0xff]
    %v1021 = vld [vmem:[#allocation3 + $0x38] sm:$0xff]
    %v1022 = vld [vmem:[#allocation3 + $0x40] sm:$0xff]
    %v1023 = vld [vmem:[#allocation3 + $0x48] sm:$0xff]
    %v1024 = vld [vmem:[#allocation3 + $0x50] sm:$0xff]
    %v1025 = vld [vmem:[#allocation3 + $0x58] sm:$0xff]
    %v1026 = vld [vmem:[#allocation3 + $0x60] sm:$0xff]
    %v1027 = vld [vmem:[#allocation3 + $0x68] sm:$0xff]
    %v1028 = vld [vmem:[#allocation3 + $0x70] sm:$0xff]
    %v1029 = vld [vmem:[#allocation3 + $0x78] sm:$0xff]
    %v1030 = vld [vmem:[#allocation3 + $0x80] sm:$0xff]
    %v1031 = vld [vmem:[#allocation3 + $0x88] sm:$0xff]
    %v1032 = vld [vmem:[#allocation3 + $0x90] sm:$0xff]
    %v1033 = vld [vmem:[#allocation3 + $0x98] sm:$0xff]
    %v1034 = vld [vmem:[#allocation3 + $0xa0] sm:$0xff]
    %v1035 = vld [vmem:[#allocation3 + $0xa8] sm:$0xff]
    %v1036 = vld [vmem:[#allocation3 + $0xb0] sm:$0xff]
    %v1037 = vld [vmem:[#allocation3 + $0xb8] sm:$0xff]
    %v1038 = vld [vmem:[#allocation3 + $0xc0] sm:$0xff]
    %v1039 = vld [vmem:[#allocation3 + $0xc8] sm:$0xff]
    %v1040 = vld [vmem:[#allocation3 + $0xd0] sm:$0xff]
    %v1041 = vld [vmem:[#allocation3 + $0xd8] sm:$0xff]
    %v1042 = vld [vmem:[#allocation3 + $0xe0] sm:$0xff]
    %v1043 = vld [vmem:[#allocation3 + $0xe8] sm:$0xff]
    %v1044 = vld [vmem:[#allocation3 + $0xf0] sm:$0xff]
    %v1045 = vld [vmem:[#allocation3 + $0xf8] sm:$0xff]
    %v1046 = vld [vmem:[#allocation3 + $0x100] sm:$0xff]
    %v1047 = vld [vmem:[#allocation3 + $0x108] sm:$0xff]
    %v1048 = vld [vmem:[#allocation3 + $0x110] sm:$0xff]
    %v1049 = vld [vmem:[#allocation3 + $0x118] sm:$0xff]
    %v1050 = vld [vmem:[#allocation3 + $0x120] sm:$0xff]
    %v1051 = vld [vmem:[#allocation3 + $0x128] sm:$0xff]
    %v1052 = vld [vmem:[#allocation3 + $0x130] sm:$0xff]
    %v1053 = vld [vmem:[#allocation3 + $0x138] sm:$0xff]
    %v1054 = vld [vmem:[#allocation3 + $0x140] sm:$0xff]
    %v1055 = vld [vmem:[#allocation3 + $0x148] sm:$0xff]
    %v1056 = vld [vmem:[#allocation3 + $0x150] sm:$0xff]
    %v1057 = vld [vmem:[#allocation3 + $0x158] sm:$0xff]
    %v1058 = vld [vmem:[#allocation3 + $0x160] sm:$0xff]
    %v1059 = vld [vmem:[#allocation3 + $0x168] sm:$0xff]
    %v1060 = vld [vmem:[#allocation3 + $0x170] sm:$0xff]
    %v1061 = vld [vmem:[#allocation3 + $0x178] sm:$0xff]
    %v1062 = vld [vmem:[#allocation3 + $0x180] sm:$0xff]
    %v1063 = vld [vmem:[#allocation3 + $0x188] sm:$0xff]
    %v1064 = vld [vmem:[#allocation3 + $0x190] sm:$0xff]
    %v1065 = vld [vmem:[#allocation3 + $0x198] sm:$0xff]
    %v1066 = vld [vmem:[#allocation3 + $0x1a0] sm:$0xff]
    %v1067 = vld [vmem:[#allocation3 + $0x1a8] sm:$0xff]
    %v1068 = vld [vmem:[#allocation3 + $0x1b0] sm:$0xff]
    %v1069 = vld [vmem:[#allocation3 + $0x1b8] sm:$0xff]
    %v1070 = vld [vmem:[#allocation3 + $0x1c0] sm:$0xff]
    %v1071 = vld [vmem:[#allocation3 + $0x1c8] sm:$0xff]
    %v1072 = vld [vmem:[#allocation3 + $0x1d0] sm:$0xff]
    %v1073 = vld [vmem:[#allocation3 + $0x1d8] sm:$0xff]
    %v1074 = vld [vmem:[#allocation3 + $0x1e0] sm:$0xff]
    %v1075 = vld [vmem:[#allocation3 + $0x1e8] sm:$0xff]
    %v1076 = vld [vmem:[#allocation3 + $0x1f0] sm:$0xff]
    %v1077 = vld [vmem:[#allocation3 + $0x1f8] sm:$0xff]
    %1078 = vmatpush.msra.mxu0 %v1074
    %1079 = vmatpush.msra.mxu0 %v1070
    %1080 = vmatpush.msra.mxu0 %v1066
    %1081 = vmatpush.msra.mxu0 %v1062
    %1082 = vmatpush.msra.mxu0 %v1058
    %1083 = vmatpush.msra.mxu0 %v1054
    %1084 = vmatpush.msra.mxu0 %v1050
    %1085 = vmatpush.msra.mxu0 %v1046
    %1086 = vmatpush.msra.mxu0 %v1042
    %1087 = vmatpush.msra.mxu0 %v1038
    %1088 = vmatpush.msra.mxu0 %v1034
    %1089 = vmatpush.msra.mxu0 %v1030
    %1090 = vmatpush.msra.mxu0 %v1026
    %1091 = vmatpush.msra.mxu0 %v1022
    %1092 = vmatpush.msra.mxu0 %v1018
    %1093 = vmatpush.msra.mxu0 %v1014
    %1094 = vmatmul.f32.gmra.mxu0 %v971
    %v1095 = vpop.f32.mrf.mxu0
    %v1096 = vadd.f32 0.0, %v1095
    %1097 = vdwg.mxu0
    %1098 = vmatpush.msra.mxu0 %v1075
    %1099 = vmatpush.msra.mxu0 %v1071
    %1100 = vmatpush.msra.mxu0 %v1067
    %1101 = vmatpush.msra.mxu0 %v1063
    %1102 = vmatpush.msra.mxu0 %v1059
    %1103 = vmatpush.msra.mxu0 %v1055
    %1104 = vmatpush.msra.mxu0 %v1051
    %1105 = vmatpush.msra.mxu0 %v1047
    %1106 = vmatpush.msra.mxu0 %v1043
    %1107 = vmatpush.msra.mxu0 %v1039
    %1108 = vmatpush.msra.mxu0 %v1035
    %1109 = vmatpush.msra.mxu0 %v1031
    %1110 = vmatpush.msra.mxu0 %v1027
    %1111 = vmatpush.msra.mxu0 %v1023
    %1112 = vmatpush.msra.mxu0 %v1019
    %1113 = vmatpush.msra.mxu0 %v1015
    %1114 = vmatmul.f32.gmra.mxu0 %v971
    %v1115 = vpop.f32.mrf.mxu0
    %v1116 = vadd.f32 0.0, %v1115
    %1117 = vdwg.mxu0
    %1118 = vmatpush.msra.mxu0 %v1076
    %1119 = vmatpush.msra.mxu0 %v1072
    %1120 = vmatpush.msra.mxu0 %v1068
    %1121 = vmatpush.msra.mxu0 %v1064
    %1122 = vmatpush.msra.mxu0 %v1060
    %1123 = vmatpush.msra.mxu0 %v1056
    %1124 = vmatpush.msra.mxu0 %v1052
    %1125 = vmatpush.msra.mxu0 %v1048
    %1126 = vmatpush.msra.mxu0 %v1044
    %1127 = vmatpush.msra.mxu0 %v1040
    %1128 = vmatpush.msra.mxu0 %v1036
    %1129 = vmatpush.msra.mxu0 %v1032
    %1130 = vmatpush.msra.mxu0 %v1028
    %1131 = vmatpush.msra.mxu0 %v1024
    %1132 = vmatpush.msra.mxu0 %v1020
    %1133 = vmatpush.msra.mxu0 %v1016
    %1134 = vmatmul.f32.gmra.mxu0 %v971
    %v1135 = vpop.f32.mrf.mxu0
    %v1136 = vadd.f32 0.0, %v1135
    %1137 = vdwg.mxu0
    %1138 = vmatpush.msra.mxu0 %v1077
    %1139 = vmatpush.msra.mxu0 %v1073
    %1140 = vmatpush.msra.mxu0 %v1069
    %1141 = vmatpush.msra.mxu0 %v1065
    %1142 = vmatpush.msra.mxu0 %v1061
    %1143 = vmatpush.msra.mxu0 %v1057
    %1144 = vmatpush.msra.mxu0 %v1053
    %1145 = vmatpush.msra.mxu0 %v1049
    %1146 = vmatpush.msra.mxu0 %v1045
    %1147 = vmatpush.msra.mxu0 %v1041
    %1148 = vmatpush.msra.mxu0 %v1037
    %1149 = vmatpush.msra.mxu0 %v1033
    %1150 = vmatpush.msra.mxu0 %v1029
    %1151 = vmatpush.msra.mxu0 %v1025
    %1152 = vmatpush.msra.mxu0 %v1021
    %1153 = vmatpush.msra.mxu0 %v1017
    %1154 = vmatmul.f32.gmra.mxu0 %v971
    %v1155 = vpop.f32.mrf.mxu0
    %v1156 = vadd.f32 0.0, %v1155
    %1157 = vdwg.mxu0
    %v1158 = vadd.f32 %v1010, %v1096
    %v1159 = vadd.f32 %v1011, %v1116
    %v1160 = vadd.f32 %v1012, %v1136
    %v1161 = vadd.f32 %v1013, %v1156
    %v1162 = vmul.f32 %v1158, 0.5
    %v1163 = vtanh.pop %v1162
    %v1164 = vadd.f32 %v1163, 1.0
    %v1165 = vmul.f32 %v1164, 0.5
    %v1166 = vmul.f32 %v1159, 0.5
    %v1167 = vtanh.pop %v1166
    %v1168 = vadd.f32 %v1167, 1.0
    %v1169 = vmul.f32 %v1168, 0.5
    %v1170 = vtanh.pop %v1160
    %v1171 = vmul.f32 %v1161, 0.5
    %v1172 = vtanh.pop %v1171
    %v1173 = vadd.f32 %v1172, 1.0
    %v1174 = vmul.f32 %v1173, 0.5
    %v1175 = vmul.f32 %v1169, %v969
    %v1176 = vmul.f32 %v1165, %v1170
    %v1177 = vadd.f32 %v1175, %v1176
    %v1178 = vtanh.pop %v1177
    %v1179 = vmul.f32 %v1174, %v1178
    %v1180 = vld [vmem:[#allocation7] sm:$0xff]
    %v1181 = vld [vmem:[#allocation7 + $0x8] sm:$0xff]
    %v1182 = vld [vmem:[#allocation7 + $0x10] sm:$0xff]
    %v1183 = vld [vmem:[#allocation7 + $0x18] sm:$0xff]
    %v1184 = vld [vmem:[#allocation7 + $0x20] sm:$0xff]
    %v1185 = vld [vmem:[#allocation7 + $0x28] sm:$0xff]
    %v1186 = vld [vmem:[#allocation7 + $0x30] sm:$0xff]
    %v1187 = vld [vmem:[#allocation7 + $0x38] sm:$0xff]
    %v1188 = vld [vmem:[#allocation7 + $0x40] sm:$0xff]
    %v1189 = vld [vmem:[#allocation7 + $0x48] sm:$0xff]
    %v1190 = vld [vmem:[#allocation7 + $0x50] sm:$0xff]
    %v1191 = vld [vmem:[#allocation7 + $0x58] sm:$0xff]
    %v1192 = vld [vmem:[#allocation7 + $0x60] sm:$0xff]
    %v1193 = vld [vmem:[#allocation7 + $0x68] sm:$0xff]
    %v1194 = vld [vmem:[#allocation7 + $0x70] sm:$0xff]
    %v1195 = vld [vmem:[#allocation7 + $0x78] sm:$0xff]
    %1196 = vmatpush.msra.mxu0 %v1195
    %1197 = vmatpush.msra.mxu0 %v1194
    %1198 = vmatpush.msra.mxu0 %v1193
    %1199 = vmatpush.msra.mxu0 %v1192
    %1200 = vmatpush.msra.mxu0 %v1191
    %1201 = vmatpush.msra.mxu0 %v1190
    %1202 = vmatpush.msra.mxu0 %v1189
    %1203 = vmatpush.msra.mxu0 %v1188
    %1204 = vmatpush.msra.mxu0 %v1187
    %1205 = vmatpush.msra.mxu0 %v1186
    %1206 = vmatpush.msra.mxu0 %v1185
    %1207 = vmatpush.msra.mxu0 %v1184
    %1208 = vmatpush.msra.mxu0 %v1183
    %1209 = vmatpush.msra.mxu0 %v1182
    %1210 = vmatpush.msra.mxu0 %v1181
    %1211 = vmatpush.msra.mxu0 %v1180
    %1212 = vmatmul.f32.gmra.mxu0 %v1179
    %v1213 = vpop.f32.mrf.mxu0
    %v1214 = vadd.f32 %v384, %v1213
    %1215 = vdwg.mxu0
    %v1216 = vmax.f32 %v1214, 0.0
    %1217 = vst [vmem:[%s10 + $0x18] sm:$0xff] %v1216
    %v1218 = vld [vmem:[#allocation2 + $0x80] sm:$0xff]
    %v1219 = vld [vmem:[#allocation2 + $0x88] sm:$0xff]
    %v1220 = vld [vmem:[#allocation2 + $0x90] sm:$0xff]
    %v1221 = vld [vmem:[#allocation2 + $0x98] sm:$0xff]
    %v1222 = vld [vmem:[#allocation3] sm:$0xff]
    %v1223 = vld [vmem:[#allocation3 + $0x8] sm:$0xff]
    %v1224 = vld [vmem:[#allocation3 + $0x10] sm:$0xff]
    %v1225 = vld [vmem:[#allocation3 + $0x18] sm:$0xff]
    %v1226 = vld [vmem:[#allocation3 + $0x20] sm:$0xff]
    %v1227 = vld [vmem:[#allocation3 + $0x28] sm:$0xff]
    %v1228 = vld [vmem:[#allocation3 + $0x30] sm:$0xff]
    %v1229 = vld [vmem:[#allocation3 + $0x38] sm:$0xff]
    %v1230 = vld [vmem:[#allocation3 + $0x40] sm:$0xff]
    %v1231 = vld [vmem:[#allocation3 + $0x48] sm:$0xff]
    %v1232 = vld [vmem:[#allocation3 + $0x50] sm:$0xff]
    %v1233 = vld [vmem:[#allocation3 + $0x58] sm:$0xff]
    %v1234 = vld [vmem:[#allocation3 + $0x60] sm:$0xff]
    %v1235 = vld [vmem:[#allocation3 + $0x68] sm:$0xff]
    %v1236 = vld [vmem:[#allocation3 + $0x70] sm:$0xff]
    %v1237 = vld [vmem:[#allocation3 + $0x78] sm:$0xff]
    %v1238 = vld [vmem:[#allocation3 + $0x80] sm:$0xff]
    %v1239 = vld [vmem:[#allocation3 + $0x88] sm:$0xff]
    %v1240 = vld [vmem:[#allocation3 + $0x90] sm:$0xff]
    %v1241 = vld [vmem:[#allocation3 + $0x98] sm:$0xff]
    %v1242 = vld [vmem:[#allocation3 + $0xa0] sm:$0xff]
    %v1243 = vld [vmem:[#allocation3 + $0xa8] sm:$0xff]
    %v1244 = vld [vmem:[#allocation3 + $0xb0] sm:$0xff]
    %v1245 = vld [vmem:[#allocation3 + $0xb8] sm:$0xff]
    %v1246 = vld [vmem:[#allocation3 + $0xc0] sm:$0xff]
    %v1247 = vld [vmem:[#allocation3 + $0xc8] sm:$0xff]
    %v1248 = vld [vmem:[#allocation3 + $0xd0] sm:$0xff]
    %v1249 = vld [vmem:[#allocation3 + $0xd8] sm:$0xff]
    %v1250 = vld [vmem:[#allocation3 + $0xe0] sm:$0xff]
    %v1251 = vld [vmem:[#allocation3 + $0xe8] sm:$0xff]
    %v1252 = vld [vmem:[#allocation3 + $0xf0] sm:$0xff]
    %v1253 = vld [vmem:[#allocation3 + $0xf8] sm:$0xff]
    %v1254 = vld [vmem:[#allocation3 + $0x100] sm:$0xff]
    %v1255 = vld [vmem:[#allocation3 + $0x108] sm:$0xff]
    %v1256 = vld [vmem:[#allocation3 + $0x110] sm:$0xff]
    %v1257 = vld [vmem:[#allocation3 + $0x118] sm:$0xff]
    %v1258 = vld [vmem:[#allocation3 + $0x120] sm:$0xff]
    %v1259 = vld [vmem:[#allocation3 + $0x128] sm:$0xff]
    %v1260 = vld [vmem:[#allocation3 + $0x130] sm:$0xff]
    %v1261 = vld [vmem:[#allocation3 + $0x138] sm:$0xff]
    %v1262 = vld [vmem:[#allocation3 + $0x140] sm:$0xff]
    %v1263 = vld [vmem:[#allocation3 + $0x148] sm:$0xff]
    %v1264 = vld [vmem:[#allocation3 + $0x150] sm:$0xff]
    %v1265 = vld [vmem:[#allocation3 + $0x158] sm:$0xff]
    %v1266 = vld [vmem:[#allocation3 + $0x160] sm:$0xff]
    %v1267 = vld [vmem:[#allocation3 + $0x168] sm:$0xff]
    %v1268 = vld [vmem:[#allocation3 + $0x170] sm:$0xff]
    %v1269 = vld [vmem:[#allocation3 + $0x178] sm:$0xff]
    %v1270 = vld [vmem:[#allocation3 + $0x180] sm:$0xff]
    %v1271 = vld [vmem:[#allocation3 + $0x188] sm:$0xff]
    %v1272 = vld [vmem:[#allocation3 + $0x190] sm:$0xff]
    %v1273 = vld [vmem:[#allocation3 + $0x198] sm:$0xff]
    %v1274 = vld [vmem:[#allocation3 + $0x1a0] sm:$0xff]
    %v1275 = vld [vmem:[#allocation3 + $0x1a8] sm:$0xff]
    %v1276 = vld [vmem:[#allocation3 + $0x1b0] sm:$0xff]
    %v1277 = vld [vmem:[#allocation3 + $0x1b8] sm:$0xff]
    %v1278 = vld [vmem:[#allocation3 + $0x1c0] sm:$0xff]
    %v1279 = vld [vmem:[#allocation3 + $0x1c8] sm:$0xff]
    %v1280 = vld [vmem:[#allocation3 + $0x1d0] sm:$0xff]
    %v1281 = vld [vmem:[#allocation3 + $0x1d8] sm:$0xff]
    %v1282 = vld [vmem:[#allocation3 + $0x1e0] sm:$0xff]
    %v1283 = vld [vmem:[#allocation3 + $0x1e8] sm:$0xff]
    %v1284 = vld [vmem:[#allocation3 + $0x1f0] sm:$0xff]
    %v1285 = vld [vmem:[#allocation3 + $0x1f8] sm:$0xff]
    %1286 = vmatpush.msra.mxu0 %v1282
    %1287 = vmatpush.msra.mxu0 %v1278
    %1288 = vmatpush.msra.mxu0 %v1274
    %1289 = vmatpush.msra.mxu0 %v1270
    %1290 = vmatpush.msra.mxu0 %v1266
    %1291 = vmatpush.msra.mxu0 %v1262
    %1292 = vmatpush.msra.mxu0 %v1258
    %1293 = vmatpush.msra.mxu0 %v1254
    %1294 = vmatpush.msra.mxu0 %v1250
    %1295 = vmatpush.msra.mxu0 %v1246
    %1296 = vmatpush.msra.mxu0 %v1242
    %1297 = vmatpush.msra.mxu0 %v1238
    %1298 = vmatpush.msra.mxu0 %v1234
    %1299 = vmatpush.msra.mxu0 %v1230
    %1300 = vmatpush.msra.mxu0 %v1226
    %1301 = vmatpush.msra.mxu0 %v1222
    %1302 = vmatmul.f32.gmra.mxu0 %v1179
    %v1303 = vpop.f32.mrf.mxu0
    %v1304 = vadd.f32 0.0, %v1303
    %1305 = vdwg.mxu0
    %1306 = vmatpush.msra.mxu0 %v1283
    %1307 = vmatpush.msra.mxu0 %v1279
    %1308 = vmatpush.msra.mxu0 %v1275
    %1309 = vmatpush.msra.mxu0 %v1271
    %1310 = vmatpush.msra.mxu0 %v1267
    %1311 = vmatpush.msra.mxu0 %v1263
    %1312 = vmatpush.msra.mxu0 %v1259
    %1313 = vmatpush.msra.mxu0 %v1255
    %1314 = vmatpush.msra.mxu0 %v1251
    %1315 = vmatpush.msra.mxu0 %v1247
    %1316 = vmatpush.msra.mxu0 %v1243
    %1317 = vmatpush.msra.mxu0 %v1239
    %1318 = vmatpush.msra.mxu0 %v1235
    %1319 = vmatpush.msra.mxu0 %v1231
    %1320 = vmatpush.msra.mxu0 %v1227
    %1321 = vmatpush.msra.mxu0 %v1223
    %1322 = vmatmul.f32.gmra.mxu0 %v1179
    %v1323 = vpop.f32.mrf.mxu0
    %v1324 = vadd.f32 0.0, %v1323
    %1325 = vdwg.mxu0
    %1326 = vmatpush.msra.mxu0 %v1284
    %1327 = vmatpush.msra.mxu0 %v1280
    %1328 = vmatpush.msra.mxu0 %v1276
    %1329 = vmatpush.msra.mxu0 %v1272
    %1330 = vmatpush.msra.mxu0 %v1268
    %1331 = vmatpush.msra.mxu0 %v1264
    %1332 = vmatpush.msra.mxu0 %v1260
    %1333 = vmatpush.msra.mxu0 %v1256
    %1334 = vmatpush.msra.mxu0 %v1252
    %1335 = vmatpush.msra.mxu0 %v1248
    %1336 = vmatpush.msra.mxu0 %v1244
    %1337 = vmatpush.msra.mxu0 %v1240
    %1338 = vmatpush.msra.mxu0 %v1236
    %1339 = vmatpush.msra.mxu0 %v1232
    %1340 = vmatpush.msra.mxu0 %v1228
    %1341 = vmatpush.msra.mxu0 %v1224
    %1342 = vmatmul.f32.gmra.mxu0 %v1179
    %v1343 = vpop.f32.mrf.mxu0
    %v1344 = vadd.f32 0.0, %v1343
    %1345 = vdwg.mxu0
    %1346 = vmatpush.msra.mxu0 %v1285
    %1347 = vmatpush.msra.mxu0 %v1281
    %1348 = vmatpush.msra.mxu0 %v1277
    %1349 = vmatpush.msra.mxu0 %v1273
    %1350 = vmatpush.msra.mxu0 %v1269
    %1351 = vmatpush.msra.mxu0 %v1265
    %1352 = vmatpush.msra.mxu0 %v1261
    %1353 = vmatpush.msra.mxu0 %v1257
    %1354 = vmatpush.msra.mxu0 %v1253
    %1355 = vmatpush.msra.mxu0 %v1249
    %1356 = vmatpush.msra.mxu0 %v1245
    %1357 = vmatpush.msra.mxu0 %v1241
    %1358 = vmatpush.msra.mxu0 %v1237
    %1359 = vmatpush.msra.mxu0 %v1233
    %1360 = vmatpush.msra.mxu0 %v1229
    %1361 = vmatpush.msra.mxu0 %v1225
    %1362 = vmatmul.f32.gmra.mxu0 %v1179
    %v1363 = vpop.f32.mrf.mxu0
    %v1364 = vadd.f32 0.0, %v1363
    %1365 = vdwg.mxu0
    %v1366 = vadd.f32 %v1218, %v1304
    %v1367 = vadd.f32 %v1219, %v1324
    %v1368 = vadd.f32 %v1220, %v1344
    %v1369 = vadd.f32 %v1221, %v1364
    %v1370 = vmul.f32 %v1366, 0.5
    %v1371 = vtanh.pop %v1370
    %v1372 = vadd.f32 %v1371, 1.0
    %v1373 = vmul.f32 %v1372, 0.5
    %v1374 = vmul.f32 %v1367, 0.5
    %v1375 = vtanh.pop %v1374
    %v1376 = vadd.f32 %v1375, 1.0
    %v1377 = vmul.f32 %v1376, 0.5
    %v1378 = vtanh.pop %v1368
    %v1379 = vmul.f32 %v1369, 0.5
    %v1380 = vtanh.pop %v1379
    %v1381 = vadd.f32 %v1380, 1.0
    %v1382 = vmul.f32 %v1381, 0.5
    %v1383 = vmul.f32 %v1377, %v1177
    %v1384 = vmul.f32 %v1373, %v1378
    %v1385 = vadd.f32 %v1383, %v1384
    %v1386 = vtanh.pop %v1385
    %v1387 = vmul.f32 %v1382, %v1386
    %v1388 = vld [vmem:[#allocation7] sm:$0xff]
    %v1389 = vld [vmem:[#allocation7 + $0x8] sm:$0xff]
    %v1390 = vld [vmem:[#allocation7 + $0x10] sm:$0xff]
    %v1391 = vld [vmem:[#allocation7 + $0x18] sm:$0xff]
    %v1392 = vld [vmem:[#allocation7 + $0x20] sm:$0xff]
    %v1393 = vld [vmem:[#allocation7 + $0x28] sm:$0xff]
    %v1394 = vld [vmem:[#allocation7 + $0x30] sm:$0xff]
    %v1395 = vld [vmem:[#allocation7 + $0x38] sm:$0xff]
    %v1396 = vld [vmem:[#allocation7 + $0x40] sm:$0xff]
    %v1397 = vld [vmem:[#allocation7 + $0x48] sm:$0xff]
    %v1398 = vld [vmem:[#allocation7 + $0x50] sm:$0xff]
    %v1399 = vld [vmem:[#allocation7 + $0x58] sm:$0xff]
    %v1400 = vld [vmem:[#allocation7 + $0x60] sm:$0xff]
    %v1401 = vld [vmem:[#allocation7 + $0x68] sm:$0xff]
    %v1402 = vld [vmem:[#allocation7 + $0x70] sm:$0xff]
    %v1403 = vld [vmem:[#allocation7 + $0x78] sm:$0xff]
    %1404 = vmatpush.msra.mxu0 %v1403
    %1405 = vmatpush.msra.mxu0 %v1402
    %1406 = vmatpush.msra.mxu0 %v1401
    %1407 = vmatpush.msra.mxu0 %v1400
    %1408 = vmatpush.msra.mxu0 %v1399
    %1409 = vmatpush.msra.mxu0 %v1398
    %1410 = vmatpush.msra.mxu0 %v1397
    %1411 = vmatpush.msra.mxu0 %v1396
    %1412 = vmatpush.msra.mxu0 %v1395
    %1413 = vmatpush.msra.mxu0 %v1394
    %1414 = vmatpush.msra.mxu0 %v1393
    %1415 = vmatpush.msra.mxu0 %v1392
    %1416 = vmatpush.msra.mxu0 %v1391
    %1417 = vmatpush.msra.mxu0 %v1390
    %1418 = vmatpush.msra.mxu0 %v1389
    %1419 = vmatpush.msra.mxu0 %v1388
    %1420 = vmatmul.f32.gmra.mxu0 %v1387
    %v1421 = vpop.f32.mrf.mxu0
    %v1422 = vadd.f32 %v384, %v1421
    %1423 = vdwg.mxu0
    %v1424 = vmax.f32 %v1422, 0.0
    %1425 = vst [vmem:[%s10 + $0x20] sm:$0xff] %v1424
    %v1426 = vld [vmem:[#allocation2 + $0xa0] sm:$0xff]
    %v1427 = vld [vmem:[#allocation2 + $0xa8] sm:$0xff]
    %v1428 = vld [vmem:[#allocation2 + $0xb0] sm:$0xff]
    %v1429 = vld [vmem:[#allocation2 + $0xb8] sm:$0xff]
    %v1430 = vld [vmem:[#allocation3] sm:$0xff]
    %v1431 = vld [vmem:[#allocation3 + $0x8] sm:$0xff]
    %v1432 = vld [vmem:[#allocation3 + $0x10] sm:$0xff]
    %v1433 = vld [vmem:[#allocation3 + $0x18] sm:$0xff]
    %v1434 = vld [vmem:[#allocation3 + $0x20] sm:$0xff]
    %v1435 = vld [vmem:[#allocation3 + $0x28] sm:$0xff]
    %v1436 = vld [vmem:[#allocation3 + $0x30] sm:$0xff]
    %v1437 = vld [vmem:[#allocation3 + $0x38] sm:$0xff]
    %v1438 = vld [vmem:[#allocation3 + $0x40] sm:$0xff]
    %v1439 = vld [vmem:[#allocation3 + $0x48] sm:$0xff]
    %v1440 = vld [vmem:[#allocation3 + $0x50] sm:$0xff]
    %v1441 = vld [vmem:[#allocation3 + $0x58] sm:$0xff]
    %v1442 = vld [vmem:[#allocation3 + $0x60] sm:$0xff]
    %v1443 = vld [vmem:[#allocation3 + $0x68] sm:$0xff]
    %v1444 = vld [vmem:[#allocation3 + $0x70] sm:$0xff]
    %v1445 = vld [vmem:[#allocation3 + $0x78] sm:$0xff]
    %v1446 = vld [vmem:[#allocation3 + $0x80] sm:$0xff]
    %v1447 = vld [vmem:[#allocation3 + $0x88] sm:$0xff]
    %v1448 = vld [vmem:[#allocation3 + $0x90] sm:$0xff]
    %v1449 = vld [vmem:[#allocation3 + $0x98] sm:$0xff]
    %v1450 = vld [vmem:[#allocation3 + $0xa0] sm:$0xff]
    %v1451 = vld [vmem:[#allocation3 + $0xa8] sm:$0xff]
    %v1452 = vld [vmem:[#allocation3 + $0xb0] sm:$0xff]
    %v1453 = vld [vmem:[#allocation3 + $0xb8] sm:$0xff]
    %v1454 = vld [vmem:[#allocation3 + $0xc0] sm:$0xff]
    %v1455 = vld [vmem:[#allocation3 + $0xc8] sm:$0xff]
    %v1456 = vld [vmem:[#allocation3 + $0xd0] sm:$0xff]
    %v1457 = vld [vmem:[#allocation3 + $0xd8] sm:$0xff]
    %v1458 = vld [vmem:[#allocation3 + $0xe0] sm:$0xff]
    %v1459 = vld [vmem:[#allocation3 + $0xe8] sm:$0xff]
    %v1460 = vld [vmem:[#allocation3 + $0xf0] sm:$0xff]
    %v1461 = vld [vmem:[#allocation3 + $0xf8] sm:$0xff]
    %v1462 = vld [vmem:[#allocation3 + $0x100] sm:$0xff]
    %v1463 = vld [vmem:[#allocation3 + $0x108] sm:$0xff]
    %v1464 = vld [vmem:[#allocation3 + $0x110] sm:$0xff]
    %v1465 = vld [vmem:[#allocation3 + $0x118] sm:$0xff]
    %v1466 = vld [vmem:[#allocation3 + $0x120] sm:$0xff]
    %v1467 = vld [vmem:[#allocation3 + $0x128] sm:$0xff]
    %v1468 = vld [vmem:[#allocation3 + $0x130] sm:$0xff]
    %v1469 = vld [vmem:[#allocation3 + $0x138] sm:$0xff]
    %v1470 = vld [vmem:[#allocation3 + $0x140] sm:$0xff]
    %v1471 = vld [vmem:[#allocation3 + $0x148] sm:$0xff]
    %v1472 = vld [vmem:[#allocation3 + $0x150] sm:$0xff]
    %v1473 = vld [vmem:[#allocation3 + $0x158] sm:$0xff]
    %v1474 = vld [vmem:[#allocation3 + $0x160] sm:$0xff]
    %v1475 = vld [vmem:[#allocation3 + $0x168] sm:$0xff]
    %v1476 = vld [vmem:[#allocation3 + $0x170] sm:$0xff]
    %v1477 = vld [vmem:[#allocation3 + $0x178] sm:$0xff]
    %v1478 = vld [vmem:[#allocation3 + $0x180] sm:$0xff]
    %v1479 = vld [vmem:[#allocation3 + $0x188] sm:$0xff]
    %v1480 = vld [vmem:[#allocation3 + $0x190] sm:$0xff]
    %v1481 = vld [vmem:[#allocation3 + $0x198] sm:$0xff]
    %v1482 = vld [vmem:[#allocation3 + $0x1a0] sm:$0xff]
    %v1483 = vld [vmem:[#allocation3 + $0x1a8] sm:$0xff]
    %v1484 = vld [vmem:[#allocation3 + $0x1b0] sm:$0xff]
    %v1485 = vld [vmem:[#allocation3 + $0x1b8] sm:$0xff]
    %v1486 = vld [vmem:[#allocation3 + $0x1c0] sm:$0xff]
    %v1487 = vld [vmem:[#allocation3 + $0x1c8] sm:$0xff]
    %v1488 = vld [vmem:[#allocation3 + $0x1d0] sm:$0xff]
    %v1489 = vld [vmem:[#allocation3 + $0x1d8] sm:$0xff]
    %v1490 = vld [vmem:[#allocation3 + $0x1e0] sm:$0xff]
    %v1491 = vld [vmem:[#allocation3 + $0x1e8] sm:$0xff]
    %v1492 = vld [vmem:[#allocation3 + $0x1f0] sm:$0xff]
    %v1493 = vld [vmem:[#allocation3 + $0x1f8] sm:$0xff]
    %1494 = vmatpush.msra.mxu0 %v1490
    %1495 = vmatpush.msra.mxu0 %v1486
    %1496 = vmatpush.msra.mxu0 %v1482
    %1497 = vmatpush.msra.mxu0 %v1478
    %1498 = vmatpush.msra.mxu0 %v1474
    %1499 = vmatpush.msra.mxu0 %v1470
    %1500 = vmatpush.msra.mxu0 %v1466
    %1501 = vmatpush.msra.mxu0 %v1462
    %1502 = vmatpush.msra.mxu0 %v1458
    %1503 = vmatpush.msra.mxu0 %v1454
    %1504 = vmatpush.msra.mxu0 %v1450
    %1505 = vmatpush.msra.mxu0 %v1446
    %1506 = vmatpush.msra.mxu0 %v1442
    %1507 = vmatpush.msra.mxu0 %v1438
    %1508 = vmatpush.msra.mxu0 %v1434
    %1509 = vmatpush.msra.mxu0 %v1430
    %1510 = vmatmul.f32.gmra.mxu0 %v1387
    %v1511 = vpop.f32.mrf.mxu0
    %v1512 = vadd.f32 0.0, %v1511
    %1513 = vdwg.mxu0
    %1514 = vmatpush.msra.mxu0 %v1491
    %1515 = vmatpush.msra.mxu0 %v1487
    %1516 = vmatpush.msra.mxu0 %v1483
    %1517 = vmatpush.msra.mxu0 %v1479
    %1518 = vmatpush.msra.mxu0 %v1475
    %1519 = vmatpush.msra.mxu0 %v1471
    %1520 = vmatpush.msra.mxu0 %v1467
    %1521 = vmatpush.msra.mxu0 %v1463
    %1522 = vmatpush.msra.mxu0 %v1459
    %1523 = vmatpush.msra.mxu0 %v1455
    %1524 = vmatpush.msra.mxu0 %v1451
    %1525 = vmatpush.msra.mxu0 %v1447
    %1526 = vmatpush.msra.mxu0 %v1443
    %1527 = vmatpush.msra.mxu0 %v1439
    %1528 = vmatpush.msra.mxu0 %v1435
    %1529 = vmatpush.msra.mxu0 %v1431
    %1530 = vmatmul.f32.gmra.mxu0 %v1387
    %v1531 = vpop.f32.mrf.mxu0
    %v1532 = vadd.f32 0.0, %v1531
    %1533 = vdwg.mxu0
    %1534 = vmatpush.msra.mxu0 %v1492
    %1535 = vmatpush.msra.mxu0 %v1488
    %1536 = vmatpush.msra.mxu0 %v1484
    %1537 = vmatpush.msra.mxu0 %v1480
    %1538 = vmatpush.msra.mxu0 %v1476
    %1539 = vmatpush.msra.mxu0 %v1472
    %1540 = vmatpush.msra.mxu0 %v1468
    %1541 = vmatpush.msra.mxu0 %v1464
    %1542 = vmatpush.msra.mxu0 %v1460
    %1543 = vmatpush.msra.mxu0 %v1456
    %1544 = vmatpush.msra.mxu0 %v1452
    %1545 = vmatpush.msra.mxu0 %v1448
    %1546 = vmatpush.msra.mxu0 %v1444
    %1547 = vmatpush.msra.mxu0 %v1440
    %1548 = vmatpush.msra.mxu0 %v1436
    %1549 = vmatpush.msra.mxu0 %v1432
    %1550 = vmatmul.f32.gmra.mxu0 %v1387
    %v1551 = vpop.f32.mrf.mxu0
    %v1552 = vadd.f32 0.0, %v1551
    %1553 = vdwg.mxu0
    %1554 = vmatpush.msra.mxu0 %v1493
    %1555 = vmatpush.msra.mxu0 %v1489
    %1556 = vmatpush.msra.mxu0 %v1485
    %1557 = vmatpush.msra.mxu0 %v1481
    %1558 = vmatpush.msra.mxu0 %v1477
    %1559 = vmatpush.msra.mxu0 %v1473
    %1560 = vmatpush.msra.mxu0 %v1469
    %1561 = vmatpush.msra.mxu0 %v1465
    %1562 = vmatpush.msra.mxu0 %v1461
    %1563 = vmatpush.msra.mxu0 %v1457
    %1564 = vmatpush.msra.mxu0 %v1453
    %1565 = vmatpush.msra.mxu0 %v1449
    %1566 = vmatpush.msra.mxu0 %v1445
    %1567 = vmatpush.msra.mxu0 %v1441
    %1568 = vmatpush.msra.mxu0 %v1437
    %1569 = vmatpush.msra.mxu0 %v1433
    %1570 = vmatmul.f32.gmra.mxu0 %v1387
    %v1571 = vpop.f32.mrf.mxu0
    %v1572 = vadd.f32 0.0, %v1571
    %1573 = vdwg.mxu0
    %v1574 = vadd.f32 %v1426, %v1512
    %v1575 = vadd.f32 %v1427, %v1532
    %v1576 = vadd.f32 %v1428, %v1552
    %v1577 = vadd.f32 %v1429, %v1572
    %v1578 = vmul.f32 %v1574, 0.5
    %v1579 = vtanh.pop %v1578
    %v1580 = vadd.f32 %v1579, 1.0
    %v1581 = vmul.f32 %v1580, 0.5
    %v1582 = vmul.f32 %v1575, 0.5
    %v1583 = vtanh.pop %v1582
    %v1584 = vadd.f32 %v1583, 1.0
    %v1585 = vmul.f32 %v1584, 0.5
    %v1586 = vtanh.pop %v1576
    %v1587 = vmul.f32 %v1577, 0.5
    %v1588 = vtanh.pop %v1587
    %v1589 = vadd.f32 %v1588, 1.0
    %v1590 = vmul.f32 %v1589, 0.5
    %v1591 = vmul.f32 %v1585, %v1385
    %v1592 = vmul.f32 %v1581, %v1586
    %v1593 = vadd.f32 %v1591, %v1592
    %v1594 = vtanh.pop %v1593
    %v1595 = vmul.f32 %v1590, %v1594
    %v1596 = vld [vmem:[#allocation7] sm:$0xff]
    %v1597 = vld [vmem:[#allocation7 + $0x8] sm:$0xff]
    %v1598 = vld [vmem:[#allocation7 + $0x10] sm:$0xff]
    %v1599 = vld [vmem:[#allocation7 + $0x18] sm:$0xff]
    %v1600 = vld [vmem:[#allocation7 + $0x20] sm:$0xff]
    %v1601 = vld [vmem:[#allocation7 + $0x28] sm:$0xff]
    %v1602 = vld [vmem:[#allocation7 + $0x30] sm:$0xff]
    %v1603 = vld [vmem:[#allocation7 + $0x38] sm:$0xff]
    %v1604 = vld [vmem:[#allocation7 + $0x40] sm:$0xff]
    %v1605 = vld [vmem:[#allocation7 + $0x48] sm:$0xff]
    %v1606 = vld [vmem:[#allocation7 + $0x50] sm:$0xff]
    %v1607 = vld [vmem:[#allocation7 + $0x58] sm:$0xff]
    %v1608 = vld [vmem:[#allocation7 + $0x60] sm:$0xff]
    %v1609 = vld [vmem:[#allocation7 + $0x68] sm:$0xff]
    %v1610 = vld [vmem:[#allocation7 + $0x70] sm:$0xff]
    %v1611 = vld [vmem:[#allocation7 + $0x78] sm:$0xff]
    %1612 = vmatpush.msra.mxu0 %v1611
    %1613 = vmatpush.msra.mxu0 %v1610
    %1614 = vmatpush.msra.mxu0 %v1609
    %1615 = vmatpush.msra.mxu0 %v1608
    %1616 = vmatpush.msra.mxu0 %v1607
    %1617 = vmatpush.msra.mxu0 %v1606
    %1618 = vmatpush.msra.mxu0 %v1605
    %1619 = vmatpush.msra.mxu0 %v1604
    %1620 = vmatpush.msra.mxu0 %v1603
    %1621 = vmatpush.msra.mxu0 %v1602
    %1622 = vmatpush.msra.mxu0 %v1601
    %1623 = vmatpush.msra.mxu0 %v1600
    %1624 = vmatpush.msra.mxu0 %v1599
    %1625 = vmatpush.msra.mxu0 %v1598
    %1626 = vmatpush.msra.mxu0 %v1597
    %1627 = vmatpush.msra.mxu0 %v1596
    %1628 = vmatmul.f32.gmra.mxu0 %v1595
    %v1629 = vpop.f32.mrf.mxu0
    %v1630 = vadd.f32 %v384, %v1629
    %1631 = vdwg.mxu0
    %v1632 = vmax.f32 %v1630, 0.0
    %1633 = vst [vmem:[%s10 + $0x28] sm:$0xff] %v1632
    // Predicated region
    $region62: #{base_lstm_forward.1} parent=1 // pred_check
      _
    $region63: #{base_lstm_forward.1} parent=1 // pred_check_branch
      %1635 = sbr.rel (0) target = $region65
    $region64: #{base_lstm_forward.1} parent=1 // pred_region
      _
    $region65: #{base_lstm_forward.1} parent=1 // pred_fallthru
      _
    // Predicated region
    $region66: #{base_lstm_forward.1} parent=1 // pred_check
      _
    $region67: #{base_lstm_forward.1} parent=1 // pred_check_branch
      %1637 = sbr.rel (0) target = $region69
    $region68: #{base_lstm_forward.1} parent=1 // pred_region
      _
    $region69: #{base_lstm_forward.1} parent=1 // pred_fallthru
      _
    %1638 = vsyncpa [#allocation4], 1
    %1639 = vsyncpa [#allocation6], 1
    %1640 = vsyncpa [#allocation9], 1

</llo_original>
